<compile_context>
chip_gen: v7x
topology: tpu7x:2x2x1
jax: 0.10.0
libtpu: 0.0.40
codegen_flags: <defaults>
</compile_context>

<pallas_src>
import jax
import jax.numpy as jnp
from jax.experimental import pallas as pl
from jax.experimental.pallas import tpu as pltpu


def _round_up(a: int, m: int) -> int:
    return ((a + m - 1) // m) * m


def hetero_linear_kernel(gid_ref, nvalid_ref, x_ref, w_ref, b_ref, o_ref, acc_ref):
    # gid_ref    : (num_tiles,) int32 SMEM — per-tile type id (also drives index_maps)
    # nvalid_ref : (num_tiles,) int32 SMEM — valid (non-padding) rows in this tile
    # x_ref      : (tile_m, tile_k)   VMEM, compute dtype
    # w_ref      : (tile_k, Fout_p)   VMEM, K-slice of this tile's type's weights
    # b_ref      : (1, Fout_p) f32    VMEM, bias row for this tile's type
    # o_ref      : (tile_m, Fout_p)   VMEM, out dtype
    # acc_ref    : (tile_m, Fout_p)   VMEM f32 scratch accumulator
    i = pl.program_id(0)
    k = pl.program_id(1)
    nk = pl.num_programs(1)

    @pl.when(k == 0)
    def _():
        acc_ref[...] = jnp.zeros_like(acc_ref)

    # Skip MXU work on all-padding (dummy tail) tiles.
    @pl.when(nvalid_ref[i] > 0)
    def _():
        acc_ref[...] += jnp.dot(x_ref[...], w_ref[...],
                                preferred_element_type=jnp.float32)

    @pl.when(k == nk - 1)
    def _():
        o_ref[...] = (acc_ref[...] + b_ref[...]).astype(o_ref.dtype)


def hetero_linear(x, type_vec, W, b, *,
                  tile_m=512,
                  tile_k=None,
                  compute_dtype=jnp.bfloat16,
                  out_dtype=None,
                  allow_xla_fallback=True,
                  weight_vmem_budget=16 * 1024 * 1024,
                  weight_buffers=2):
    """x: (B, N, F_in), type_vec: (N,) int in [0, T), W: (T, F_out, F_in), b: (T, F_out)."""
    B, N, Fin = x.shape
    T, Fout, _ = W.shape
    out_dtype = x.dtype if out_dtype is None else out_dtype

    # ---- small-feature fast path: padding to 128 would waste >=4x HBM / 16x MXU ----
    if allow_xla_fallback and Fin < 128 and Fout < 128:
        tv = jnp.clip(type_vec.astype(jnp.int32), 0, T - 1)
        Wg = W[tv]                      # (N, F_out, F_in)
        bg = b[tv]                      # (N, F_out)
        return (jnp.einsum("bnf,nof->bno", x, Wg) + bg[None, :, :]).astype(out_dtype)

    M = B * N
    assert tile_m % 8 == 0, "tile_m must be a multiple of 8"
    itemsize = jnp.dtype(compute_dtype).itemsize
    out_itemsize = jnp.dtype(out_dtype).itemsize

    # ---- lane-dense feature padding & K-tile selection ------------------------------
    Fout_p = _round_up(Fout, 128)
    if tile_k is None:
        # Largest multiple of 128 so a double-buffered weight block stays in budget.
        max_k = (weight_vmem_budget // (2 * Fout_p * itemsize)) // 128 * 128
        tile_k = int(max(128, max_k))
    tile_k = _round_up(tile_k, 128)
    tile_k = min(tile_k, _round_up(Fin, 128))
    Fin_p = _round_up(Fin, tile_k)          # guarantees tile_k | Fin_p
    k_tiles = Fin_p // tile_k

    # ---- flatten rows; broadcast per-node types across the batch --------------------
    xf = x.reshape(M, Fin)
    tv = jnp.broadcast_to(type_vec[None, :].astype(jnp.int32), (B, N)).reshape(M)
    tv = jnp.clip(tv, 0, T - 1)             # defined behaviour for out-of-range ids

    # ---- group rows by type; pad each group to a multiple of tile_m -----------------
    counts = jnp.bincount(tv, length=T).astype(jnp.int32)                    # (T,)
    counts_p = ((counts + tile_m - 1) // tile_m) * tile_m
    zero = jnp.zeros((1,), jnp.int32)
    start = jnp.concatenate([zero, jnp.cumsum(counts)]).astype(jnp.int32)    # (T+1,)
    pstart = jnp.concatenate([zero, jnp.cumsum(counts_p)]).astype(jnp.int32)  # (T+1,)

    order = jnp.argsort(tv)                  # stable sort by type
    tv_sorted = tv[order]
    pos = jnp.arange(M, dtype=jnp.int32)
    dst_sorted = pstart[tv_sorted] + (pos - start[tv_sorted])
    dst = jnp.zeros((M,), jnp.int32).at[order].set(dst_sorted)   # original row -> slot

    # Tight static bound on grouped + padded rows.
    MP = _round_up(M + T * (tile_m - 1), tile_m)
    num_tiles = MP // tile_m

    # Inverse map: slot -> source row (padding slots point at the appended zero row).
    src = jnp.full((MP,), M, jnp.int32).at[dst].set(pos)

    # Per-tile type id + valid-row count (scalar prefetch; also drive index_maps).
    tile_starts = jnp.arange(num_tiles, dtype=jnp.int32) * tile_m
    gid = jnp.searchsorted(pstart[1:], tile_starts, side="right").astype(jnp.int32)
    gid = jnp.minimum(gid, T - 1)
    nvalid = jnp.clip(pstart[gid] + counts[gid] - tile_starts, 0, tile_m).astype(jnp.int32)

    # ---- build padded operands (gather, not scatter) ---------------------------------
    xf_p = jnp.pad(xf, ((0, 0), (0, Fin_p - Fin))).astype(compute_dtype)
    xf_ext = jnp.concatenate([xf_p, jnp.zeros((1, Fin_p), compute_dtype)], axis=0)
    x_g = xf_ext[src]                                            # (MP, Fin_p)

    Wt = jnp.transpose(W, (0, 2, 1))                             # (T, Fin, Fout)
    Wt_p = jnp.pad(Wt, ((0, 0), (0, Fin_p - Fin), (0, Fout_p - Fout))).astype(compute_dtype)
    b_p = jnp.pad(b, ((0, 0), (0, Fout_p - Fout))).astype(jnp.float32).reshape(T, 1, Fout_p)

    # ---- scheduling hints -------------------------------------------------------------
    cost = pl.CostEstimate(
        flops=2 * MP * Fin_p * Fout_p,
        transcendentals=0,
        bytes_accessed=(MP * Fin_p * itemsize          # x tiles
                        + T * Fin_p * Fout_p * itemsize  # each weight slab fetched ~once
                        + T * Fout_p * 4                 # biases
                        + MP * Fout_p * out_itemsize),   # output
    )
    vmem_bytes = (2 * tile_m * tile_k * itemsize         # x tiles (double-buffered)
                  + max(2, weight_buffers) * tile_k * Fout_p * itemsize  # weight blocks
                  + 2 * Fout_p * 4                        # bias rows
                  + 2 * tile_m * Fout_p * out_itemsize    # output tiles
                  + tile_m * Fout_p * 4)                  # f32 accumulator scratch
    vmem_bytes = min(int(vmem_bytes * 1.25) + (2 << 20), 128 * 1024 * 1024)

    w_spec_kwargs = {}
    if weight_buffers > 2:
        # Deeper weight prefetch across group boundaries (useful on v6e).
        w_spec_kwargs["pipeline_mode"] = pl.Buffered(weight_buffers)

    out_p = pl.pallas_call(
        hetero_linear_kernel,
        out_shape=jax.ShapeDtypeStruct((MP, Fout_p), out_dtype),
        grid_spec=pltpu.PrefetchScalarGridSpec(
            num_scalar_prefetch=2,
            grid=(num_tiles, k_tiles),
            in_specs=[
                pl.BlockSpec((tile_m, tile_k), lambda i, k, g, nv: (i, k)),       # x tile
                pl.BlockSpec((None, tile_k, Fout_p),
                             lambda i, k, g, nv: (g[i], k, 0), **w_spec_kwargs),   # weight
                pl.BlockSpec((None, 1, Fout_p), lambda i, k, g, nv: (g[i], 0, 0)),  # bias
            ],
            out_specs=pl.BlockSpec((tile_m, Fout_p), lambda i, k, g, nv: (i, 0)),
            scratch_shapes=[pltpu.VMEM((tile_m, Fout_p), jnp.float32)],
        ),
        compiler_params=pltpu.CompilerParams(
            dimension_semantics=("parallel", "arbitrary"),
            vmem_limit_bytes=vmem_bytes,
        ),
        cost_estimate=cost,
    )(gid, nvalid, x_g, Wt_p, b_p)

    # Gather rows back to their original positions and drop feature padding.
    # TODO(synk): fuse this un-permute into the consumer to save one HBM pass.
    out = out_p[dst][:, :Fout]
    return out.reshape(B, N, Fout)


def reference(x, type_vec, W, b):
    # Pure-JAX reference of the PyTorch loop:
    #   out[b, n] = x[b, n] @ W[type_vec[n]].T + bias[type_vec[n]]
    Wg = W[type_vec]            # (N, F_out, F_in)
    bg = b[type_vec]            # (N, F_out)
    return jnp.einsum("bnf,nof->bno", x, Wg) + bg[None, :, :]


if __name__ == "__main__":
    key = jax.random.PRNGKey(0)

    # ---------- case 1: small features (module-sized) — fast path + forced Pallas ----
    B, N, F_in, F_out, num_types = 2, 16, 32, 32, 4
    kx, kt, kw, kb, key = jax.random.split(key, 5)
    x = jax.random.normal(kx, (B, N, F_in), dtype=jnp.float32)
    type_vec = jax.random.randint(kt, (N,), 0, num_types, dtype=jnp.int32)
    bound = 1.0 / (F_in ** 0.5)
    W = jax.random.uniform(kw, (num_types, F_out, F_in), jnp.float32, -bound, bound)
    b = jax.random.uniform(kb, (num_types, F_out), jnp.float32, -bound, bound)
    ref = reference(x, type_vec, W, b)

    # small-feature XLA fast path (default dispatch)
    out_fast = jax.block_until_ready(hetero_linear(x, type_vec, W, b))
    assert out_fast.shape == (B, N, F_out)
    assert jnp.allclose(out_fast, ref, atol=1e-4, rtol=1e-4), "fast-path mismatch"

    # forced Pallas path, exact f32
    out_f32 = jax.block_until_ready(
        hetero_linear(x, type_vec, W, b, compute_dtype=jnp.float32,
                      allow_xla_fallback=False))
    assert out_f32.shape == (B, N, F_out)
    assert jnp.allclose(out_f32, ref, atol=1e-4, rtol=1e-4), "pallas f32 mismatch"

    # forced Pallas path, bf16 operands / f32 accumulation
    out_bf16 = jax.block_until_ready(
        hetero_linear(x, type_vec, W, b, compute_dtype=jnp.bfloat16,
                      allow_xla_fallback=False))
    assert jnp.allclose(out_bf16, ref, atol=5e-2, rtol=5e-2), "pallas bf16 mismatch"

    # ---------- case 2: 128-wide features — Pallas path taken naturally --------------
    B2, N2, F2, T2 = 2, 64, 128, 4
    kx, kt, kw, kb, key = jax.random.split(key, 5)
    x2 = jax.random.normal(kx, (B2, N2, F2), dtype=jnp.float32)
    tv2 = jax.random.randint(kt, (N2,), 0, T2, dtype=jnp.int32)
    bound2 = 1.0 / (F2 ** 0.5)
    W2 = jax.random.uniform(kw, (T2, F2, F2), jnp.float32, -bound2, bound2)
    b2 = jax.random.uniform(kb, (T2, F2), jnp.float32, -bound2, bound2)
    ref2 = reference(x2, tv2, W2, b2)

    out2 = jax.block_until_ready(hetero_linear(x2, tv2, W2, b2))   # bf16 compute default
    assert out2.shape == (B2, N2, F2)
    assert jnp.allclose(out2, ref2, atol=5e-2, rtol=5e-2), "pallas 128-wide mismatch"

    out2_f32 = jax.block_until_ready(
        hetero_linear(x2, tv2, W2, b2, compute_dtype=jnp.float32))
    assert jnp.allclose(out2_f32, ref2, atol=1e-4, rtol=1e-4), "pallas 128-wide f32 mismatch"

    print("KERNEL_OK")
</pallas_src>

<mosaic_0001>
module attributes {stable_mosaic.version = 11 : i64} {
  func.func @hetero_linear_kernel(%arg0: i32, %arg1: i32, %arg2: memref<5xi32, #tpu.memory_space<smem>>, %arg3: memref<5xi32, #tpu.memory_space<smem>>, %arg4: memref<512x128xf32, #tpu.memory_space<vmem>>, %arg5: memref<1x128x128xf32, #tpu.memory_space<vmem>>, %arg6: memref<1x1x128xf32, #tpu.memory_space<vmem>>, %arg7: memref<512x128xf32, #tpu.memory_space<vmem>>, %arg8: memref<512x128xf32, #tpu.memory_space<vmem>>) attributes {dimension_semantics = [#tpu.dimension_semantics<parallel>, #tpu.dimension_semantics<arbitrary>], iteration_bounds = array<i64: 5, 1>, scalar_prefetch = 2 : i64, scratch_operands = 1 : i64, tpu.core_type = #tpu.core_type<tc>, window_params = [{transform_indices = @transform_0, window_bounds = array<i64: 512, 128>}, {transform_indices = @transform_1, window_bounds = array<i64: 1, 128, 128>}, {transform_indices = @transform_2, window_bounds = array<i64: 1, 1, 128>}, {transform_indices = @transform_3, window_bounds = array<i64: 512, 128>}]} {
    %c0_i32 = arith.constant 0 : i32
    %0 = arith.cmpi eq, %arg1, %c0_i32 : i32
    %1 = arith.extui %0 : i1 to i32
    %c0_i32_0 = arith.constant 0 : i32
    %2 = arith.cmpi ne, %1, %c0_i32_0 : i32
    scf.if %2 {
      %cst = arith.constant 0.000000e+00 : f32
      %11 = vector.broadcast %cst : f32 to vector<512x128xf32>
      %c0 = arith.constant 0 : index
      %c0_5 = arith.constant 0 : index
      %12 = vector.load %arg8[%c0, %c0_5] : memref<512x128xf32, #tpu.memory_space<vmem>>, vector<512x128xf32>
      tpu.vector_store %arg8[%c0, %c0_5], %11 {strides = array<i32>} : memref<512x128xf32, #tpu.memory_space<vmem>>, vector<512x128xf32>,
    } else {
    }
    %3 = arith.index_cast %arg0 : i32 to index
    %4 = memref.load %arg3[%3] : memref<5xi32, #tpu.memory_space<smem>>
    %c0_i32_1 = arith.constant 0 : i32
    %5 = arith.cmpi sgt, %4, %c0_i32_1 : i32
    %6 = arith.extui %5 : i1 to i32
    %c0_i32_2 = arith.constant 0 : i32
    %7 = arith.cmpi ne, %6, %c0_i32_2 : i32
    scf.if %7 {
      %c0 = arith.constant 0 : index
      %c0_5 = arith.constant 0 : index
      %11 = vector.load %arg8[%c0, %c0_5] : memref<512x128xf32, #tpu.memory_space<vmem>>, vector<512x128xf32>
      %c0_6 = arith.constant 0 : index
      %c0_7 = arith.constant 0 : index
      %12 = vector.load %arg4[%c0_6, %c0_7] : memref<512x128xf32, #tpu.memory_space<vmem>>, vector<512x128xf32>
      %c0_8 = arith.constant 0 : index
      %c0_9 = arith.constant 0 : index
      %c0_10 = arith.constant 0 : index
      %13 = vector.load %arg5[%c0_8, %c0_9, %c0_10] : memref<1x128x128xf32, #tpu.memory_space<vmem>>, vector<1x128x128xf32>
      %14 = vector.shape_cast %13 : vector<1x128x128xf32> to vector<128x128xf32>
      %cst = arith.constant dense<0.000000e+00> : vector<512x128xf32>
      %15 = tpu.matmul %12, %14, %cst {dimension_numbers = #tpu.dot_dimension_numbers<[1], [0], [0], [1], [0, 0, 1, 1], [], []>} : vector<512x128xf32>, vector<128x128xf32>, vector<512x128xf32> -> vector<512x128xf32>
      %16 = arith.addf %11, %15 : vector<512x128xf32>
      %c0_11 = arith.constant 0 : index
      %c0_12 = arith.constant 0 : index
      %17 = vector.load %arg8[%c0_11, %c0_12] : memref<512x128xf32, #tpu.memory_space<vmem>>, vector<512x128xf32>
      tpu.vector_store %arg8[%c0_11, %c0_12], %16 {strides = array<i32>} : memref<512x128xf32, #tpu.memory_space<vmem>>, vector<512x128xf32>,
    } else {
    }
    %c0_i32_3 = arith.constant 0 : i32
    %8 = arith.cmpi eq, %arg1, %c0_i32_3 : i32
    %9 = arith.extui %8 : i1 to i32
    %c0_i32_4 = arith.constant 0 : i32
    %10 = arith.cmpi ne, %9, %c0_i32_4 : i32
    scf.if %10 {
      %c0 = arith.constant 0 : index
      %c0_5 = arith.constant 0 : index
      %11 = vector.load %arg8[%c0, %c0_5] : memref<512x128xf32, #tpu.memory_space<vmem>>, vector<512x128xf32>
      %c0_6 = arith.constant 0 : index
      %c0_7 = arith.constant 0 : index
      %c0_8 = arith.constant 0 : index
      %12 = vector.load %arg6[%c0_6, %c0_7, %c0_8] : memref<1x1x128xf32, #tpu.memory_space<vmem>>, vector<1x1x128xf32>
      %13 = vector.shape_cast %12 : vector<1x1x128xf32> to vector<1x128xf32>
      %14 = vector.broadcast %13 : vector<1x128xf32> to vector<512x128xf32>
      %15 = arith.addf %11, %14 : vector<512x128xf32>
      %c0_9 = arith.constant 0 : index
      %c0_10 = arith.constant 0 : index
      %16 = vector.load %arg7[%c0_9, %c0_10] : memref<512x128xf32, #tpu.memory_space<vmem>>, vector<512x128xf32>
      tpu.vector_store %arg7[%c0_9, %c0_10], %15 {strides = array<i32>} : memref<512x128xf32, #tpu.memory_space<vmem>>, vector<512x128xf32>,
    } else {
    }
    return
  }
  func.func @transform_0(%arg0: i32, %arg1: i32, %arg2: memref<5xi32, #tpu.memory_space<smem>>, %arg3: memref<5xi32, #tpu.memory_space<smem>>) -> (i32, i32) {
    %c0_i32 = arith.constant 0 : i32
    return %arg0, %arg1 : i32, i32
  }
  func.func @transform_1(%arg0: i32, %arg1: i32, %arg2: memref<5xi32, #tpu.memory_space<smem>>, %arg3: memref<5xi32, #tpu.memory_space<smem>>) -> (i32, i32, i32) {
    %0 = arith.index_cast %arg0 : i32 to index
    %1 = memref.load %arg2[%0] : memref<5xi32, #tpu.memory_space<smem>>
    %c0_i32 = arith.constant 0 : i32
    %c0_i32_0 = arith.constant 0 : i32
    return %1, %arg1, %c0_i32 : i32, i32, i32
  }
  func.func @transform_2(%arg0: i32, %arg1: i32, %arg2: memref<5xi32, #tpu.memory_space<smem>>, %arg3: memref<5xi32, #tpu.memory_space<smem>>) -> (i32, i32, i32) {
    %0 = arith.index_cast %arg0 : i32 to index
    %1 = memref.load %arg2[%0] : memref<5xi32, #tpu.memory_space<smem>>
    %c0_i32 = arith.constant 0 : i32
    %c0_i32_0 = arith.constant 0 : i32
    %c0_i32_1 = arith.constant 0 : i32
    return %1, %c0_i32, %c0_i32_0 : i32, i32, i32
  }
  func.func @transform_3(%arg0: i32, %arg1: i32, %arg2: memref<5xi32, #tpu.memory_space<smem>>, %arg3: memref<5xi32, #tpu.memory_space<smem>>) -> (i32, i32) {
    %c0_i32 = arith.constant 0 : i32
    %c0_i32_0 = arith.constant 0 : i32
    return %arg0, %c0_i32 : i32, i32
  }
}

</mosaic_0001>

<llo_original>
// kernel: tpu_custom_call.1
$region0: #{tpu_custom_call.1}
  #allocation0 [shape = 'u32[]', space=smem, size = 0x4, offset = 0x4, fixed_abs, tag = 'smem constant byte address 0x4 - core index']
  #allocation1 [shape = 'u32[144,128]{1,0:T(1,128)}', space=vmem, size = 0x12000, scoped, tag = 'internal scratch']
  #allocation2 [shape = 'f32[512,128]{1,0:T(8,128)}', space=vmem, size = 0x40000, scoped, tag = 'scratch operand']
  #allocation3 [shape = 's32[1]{0}', space=sflag, size = 0x4, scoped, tag = 'scoped memory for tpu_custom_call.1']
  #allocation4 [shape = 'u8[512]{0}', space=smem, size = 0x200, scoped, tag = 'prefetched SMEM operand 0']
  #allocation5 [shape = 'u8[512]{0}', space=smem, size = 0x200, scoped, tag = 'prefetched SMEM operand 1']
  %s0 = inlined_call_operand.hbm [shape: s32[5], index: 0, kind: input, shape index: {}]
  %s1 = inlined_call_operand.hbm [shape: s32[5], index: 1, kind: input, shape index: {}]
  %s2 = inlined_call_operand.hbm [shape: f32[2560,128], index: 2, kind: input, shape index: {}]
  %s3 = inlined_call_operand.hbm [shape: f32[4,128,128], index: 3, kind: input, shape index: {}]
  %s4 = inlined_call_operand.hbm [shape: f32[4,1,128], index: 4, kind: input, shape index: {}]
  %s5 = inlined_call_operand.hbm [shape: f32[2560,128], index: 5, kind: output, shape index: {}]
  %s6 = sld [smem:[#allocation0]]
  $region69: #{tpu_custom_call.1} parent=0
    _
  %s8 = ssub.s32 1, %s6
  %s9 = scalar_select 0, %s8, %s6
  %11 = dma.hbm_to_smem %s0, 16, [#allocation4], [#allocation3]
  %13 = dma.hbm_to_smem %s1, 16, [#allocation5], [#allocation3]
  %14 = dma.done [#allocation3], 32
  %15 = sfence
  $region1: #{tpu_custom_call.1} parent=0
    #allocation6 [shape = 'u8[524288]{0}', space=vmem, size = 0x80000, scoped, tag = 'input window, operand 2']
    #allocation7 [shape = 's32[2]{0}', space=sflag, size = 0x8, scoped, tag = 'scoped memory for tpu_custom_call.1']
    #allocation8 [shape = 's32[2]{0}', space=sflag, size = 0x8, scoped, tag = 'scoped memory for tpu_custom_call.1']
    #allocation9 [shape = 'u8[131072]{0}', space=vmem, size = 0x20000, scoped, tag = 'input window, operand 3']
    #allocation10 [shape = 's32[2]{0}', space=sflag, size = 0x8, scoped, tag = 'scoped memory for tpu_custom_call.1']
    #allocation11 [shape = 'u8[1024]{0}', space=vmem, size = 0x400, scoped, tag = 'input window, operand 4']
    #allocation12 [shape = 'u8[524288]{0}', space=vmem, size = 0x80000, scoped, tag = 'output window, operand 0']
    %16 = vsyncpa [#allocation7], 0
    %s17 = scalar_lea.sflag [#allocation7], 1
    %18 = vsyncpa %s17, 0
    %19 = vsyncpa [#allocation10], 0
    %s20 = scalar_lea.sflag [#allocation10], 1
    %21 = vsyncpa %s20, 0
    %22 = vsyncpa [#allocation8], 0
    %s23 = scalar_lea.sflag [#allocation8], 1
    %24 = vsyncpa %s23, 0
    loop: start=0, step=1, limit=7
    $region2: #{tpu_custom_call.1} parent=1 // loop_pre_header
      _
    $region3: #{tpu_custom_call.1} parent=1 // loop_header
      %s26 = sphi 0, %s30
      %p27 = scmp.ge.s32.totalorder %s26, 7
      %s33 = sphi 0, %s45
      %s34 = sphi 0, %s41
      %s35 = sphi 0, %s33
      %s36 = sphi 0, %s34
      %s37 = sphi 0, %s35
      %s38 = sphi 0, %s36
      %s50 = sphi 0, %s52
      %s53 = sphi 0, %s50
      %s54 = sphi 0, %s53
      %s70 = sphi 0, %s54
      %s80 = sphi 0, %s82
      %s83 = sphi 0, %s80
      %s84 = sphi 0, %s83
      %s100 = sphi 0, %s84
      %s108 = sphi 0, %s110
      %s111 = sphi 0, %s108
      %s112 = sphi 0, %s111
      %s128 = sphi 0, %s112
      %s134 = sphi 0, %s136
      %s137 = sphi 0, %s134
      %s138 = sphi 0, %s137
      %s154 = sphi 0, %s138
    $region4: #{tpu_custom_call.1} parent=1 // loop_header_branch
      %29 = sbr.rel (%p27) target = $region8
    $region5: #{tpu_custom_call.1} parent=1 // loop_body
      %s31 = ssub.s32 %s26, 1
      %s32 = ssub.s32 %s26, 2
      %s39 = sadd.s32 1, %s34
      %p40 = scmp.ge.s32.totalorder %s39, 1
      %s41 = scalar_select %p40, 0, %s39
      %s42 = sadd.s32 1, %s33
      %s43 = scalar_select %p40, %s42, %s33
      %p44 = scmp.ge.s32.totalorder %s43, 5
      %s45 = scalar_select %p44, 0, %s43
      %s46 = ssub.s32 %s33, %s45
      %s47 = ssub.s32 %s34, %s41
      %s48 = sor.u32 %s46, %s47
      %p49 = scmp.eq.s32.totalorder %s48, 0
      %s51 = sadd.s32 %s50, 1
      %s52 = scalar_select %p49, %s50, %s51
      %p55 = pneg %p49
      %p56 = scmp.eq.s32.totalorder %s26, 4
      %p57 = por %p55, %p56
      %p58 = scmp.ne.s32.totalorder %s50, %s53
      %p59 = scmp.eq.s32.totalorder %s26, 0
      %p60 = por %p58, %p59
      %p61 = scmp.ne.s32.totalorder %s50, %s53
      %p62 = scmp.eq.s32.totalorder %s31, 4
      %p63 = por %p61, %p62
      %p64 = scmp.ne.s32.totalorder %s53, %s54
      %p65 = scmp.eq.s32.totalorder %s31, 0
      %p66 = por %p64, %p65
      %p67 = scmp.ne.s32.totalorder %s53, %s54
      %p68 = scmp.eq.s32.totalorder %s32, 4
      %p69 = por %p67, %p68
      %p71 = scmp.ne.s32.totalorder %s54, %s70
      %p72 = scmp.eq.s32.totalorder %s32, 0
      %p73 = por %p71, %p72
      %s74 = sld [smem:[#allocation4 + %s33]]
      %s75 = sld [smem:[#allocation4 + %s45]]
      %s76 = ssub.s32 %s74, %s75
      %s77 = ssub.s32 %s34, %s41
      %s78 = sor.u32 %s76, %s77
      %p79 = scmp.eq.s32.totalorder %s78, 0
      %s81 = sadd.s32 %s80, 1
      %s82 = scalar_select %p79, %s80, %s81
      %p85 = pneg %p79
      %p86 = scmp.eq.s32.totalorder %s26, 4
      %p87 = por %p85, %p86
      %p88 = scmp.ne.s32.totalorder %s80, %s83
      %p89 = scmp.eq.s32.totalorder %s26, 0
      %p90 = por %p88, %p89
      %p91 = scmp.ne.s32.totalorder %s80, %s83
      %p92 = scmp.eq.s32.totalorder %s31, 4
      %p93 = por %p91, %p92
      %p94 = scmp.ne.s32.totalorder %s83, %s84
      %p95 = scmp.eq.s32.totalorder %s31, 0
      %p96 = por %p94, %p95
      %p97 = scmp.ne.s32.totalorder %s83, %s84
      %p98 = scmp.eq.s32.totalorder %s32, 4
      %p99 = por %p97, %p98
      %p101 = scmp.ne.s32.totalorder %s84, %s100
      %p102 = scmp.eq.s32.totalorder %s32, 0
      %p103 = por %p101, %p102
      %s104 = sld [smem:[#allocation4 + %s33]]
      %s105 = sld [smem:[#allocation4 + %s45]]
      %s106 = ssub.s32 %s104, %s105
      %p107 = scmp.eq.s32.totalorder %s106, 0
      %s109 = sadd.s32 %s108, 1
      %s110 = scalar_select %p107, %s108, %s109
      %p113 = pneg %p107
      %p114 = scmp.eq.s32.totalorder %s26, 4
      %p115 = por %p113, %p114
      %p116 = scmp.ne.s32.totalorder %s108, %s111
      %p117 = scmp.eq.s32.totalorder %s26, 0
      %p118 = por %p116, %p117
      %p119 = scmp.ne.s32.totalorder %s108, %s111
      %p120 = scmp.eq.s32.totalorder %s31, 4
      %p121 = por %p119, %p120
      %p122 = scmp.ne.s32.totalorder %s111, %s112
      %p123 = scmp.eq.s32.totalorder %s31, 0
      %p124 = por %p122, %p123
      %p125 = scmp.ne.s32.totalorder %s111, %s112
      %p126 = scmp.eq.s32.totalorder %s32, 4
      %p127 = por %p125, %p126
      %p129 = scmp.ne.s32.totalorder %s112, %s128
      %p130 = scmp.eq.s32.totalorder %s32, 0
      %p131 = por %p129, %p130
      %s132 = ssub.s32 %s33, %s45
      %p133 = scmp.eq.s32.totalorder %s132, 0
      %s135 = sadd.s32 %s134, 1
      %s136 = scalar_select %p133, %s134, %s135
      %p139 = pneg %p133
      %p140 = scmp.eq.s32.totalorder %s26, 4
      %p141 = por %p139, %p140
      %p142 = scmp.ne.s32.totalorder %s134, %s137
      %p143 = scmp.eq.s32.totalorder %s26, 0
      %p144 = por %p142, %p143
      %p145 = scmp.ne.s32.totalorder %s134, %s137
      %p146 = scmp.eq.s32.totalorder %s31, 4
      %p147 = por %p145, %p146
      %p148 = scmp.ne.s32.totalorder %s137, %s138
      %p149 = scmp.eq.s32.totalorder %s31, 0
      %p150 = por %p148, %p149
      %p151 = scmp.ne.s32.totalorder %s137, %s138
      %p152 = scmp.eq.s32.totalorder %s32, 4
      %p153 = por %p151, %p152
      %p155 = scmp.ne.s32.totalorder %s138, %s154
      %p156 = scmp.eq.s32.totalorder %s32, 0
      %p157 = por %p155, %p156
      %p158 = scmp.le.s32.totalorder 1, %s26
      %p159 = scmp.lt.s32.totalorder %s26, 6
      %p160 = pnand %p158, %p159
      %p161 = pneg %p160
      // Predicated region
      $region9: #{tpu_custom_call.1} parent=5 // pred_check
        _
      $region10: #{tpu_custom_call.1} parent=5 // pred_check_branch
        %163 = sbr.rel (%p160) target = $region12
      $region11: #{tpu_custom_call.1} parent=5 // pred_region
        %s164 = ssub.s32 %s26, 1
      $region12: #{tpu_custom_call.1} parent=5 // pred_fallthru
        _
      %p165 = scmp.lt.s32.totalorder %s26, 5
      // Predicated region
      $region13: #{tpu_custom_call.1} parent=5 // pred_check
        %p166 = pneg %p165
      $region14: #{tpu_custom_call.1} parent=5 // pred_check_branch
        %168 = sbr.rel (%p166) target = $region16
      $region15: #{tpu_custom_call.1} parent=5 // pred_region
        // Predicated region
        $region17: #{tpu_custom_call.1} parent=15 // pred_check
          %p169 = pneg %p60
        $region18: #{tpu_custom_call.1} parent=15 // pred_check_branch
          %171 = sbr.rel (%p169) target = $region20
        $region19: #{tpu_custom_call.1} parent=15 // pred_region
          %s172 = sand.u32 %s50, 1
          %s173 = scalar_lea.sflag [#allocation7], %s172
          %s174 = sand.u32 %s50, 1
          %s175 = smul.addr %s174, 512
          %s176 = scalar_lea.vmem [#allocation6], %s175
          %s177 = smul.u32 64, %s33
          %s179 = ssub.s32 8192, 8192
          %180 = vsyncadd %s173, %s179
          %s181 = sadd.s32 %s34, %s177
          %s182 = smul.addr %s181, 128
          %s183 = scalar_lea.hbm %s2, %s182
          %s184 = sshll.u32 %s176, 4
          %s185 = int_to_ptr.vmem [resolvable:$true] %s184
          %190 = dma.hbm_to_vmem [thread:$0]  %s183, 8192, %s185, %s173, 128, 128, 8
        $region20: #{tpu_custom_call.1} parent=15 // pred_fallthru
          _
        // Predicated region
        $region21: #{tpu_custom_call.1} parent=15 // pred_check
          %p191 = pneg %p90
        $region22: #{tpu_custom_call.1} parent=15 // pred_check_branch
          %193 = sbr.rel (%p191) target = $region24
        $region23: #{tpu_custom_call.1} parent=15 // pred_region
          %s194 = sand.u32 %s26, 1
          %s195 = scalar_lea.sflag [#allocation10], %s194
          %s196 = sand.u32 %s80, 1
          %s197 = smul.addr %s196, 128
          %s198 = scalar_lea.vmem [#allocation9], %s197
          %s199 = sld [smem:[#allocation4 + %s33]]
          %s200 = smul.u32 16, %s34
          %s202 = ssub.s32 2048, 2048
          %203 = vsyncadd %s195, %s202
          %s204 = smul.addr %s199, 16
          %s205 = sadd.s32 %s200, %s204
          %s206 = smul.addr %s205, 128
          %s207 = scalar_lea.hbm %s3, %s206
          %s208 = sshll.u32 %s198, 4
          %s209 = int_to_ptr.vmem [resolvable:$true] %s208
          %214 = dma.hbm_to_vmem [thread:$0]  %s207, 2048, %s209, %s195, 128, 128, 8
        $region24: #{tpu_custom_call.1} parent=15 // pred_fallthru
          _
        // Predicated region
        $region25: #{tpu_custom_call.1} parent=15 // pred_check
          %p215 = pneg %p118
        $region26: #{tpu_custom_call.1} parent=15 // pred_check_branch
          %217 = sbr.rel (%p215) target = $region28
        $region27: #{tpu_custom_call.1} parent=15 // pred_region
          %s218 = sand.u32 %s26, 1
          %s219 = scalar_lea.sflag [#allocation10], %s218
          %s220 = sand.u32 %s108, 1
          %s221 = scalar_lea.vmem [#allocation11], %s220
          %s222 = sld [smem:[#allocation4 + %s33]]
          %s224 = ssub.s32 16, 16
          %225 = vsyncadd %s219, %s224
          %s226 = smul.addr %s222, 16
          %s227 = scalar_lea.hbm %s4, %s226
          %s229 = sshll.u32 %s221, 4
          %s230 = int_to_ptr.vmem [resolvable:$true] %s229
          %232 = dma.hbm_to_vmem [thread:$0]  %s227, 16, %s230, %s219
        $region28: #{tpu_custom_call.1} parent=15 // pred_fallthru
          _
      $region16: #{tpu_custom_call.1} parent=5 // pred_fallthru
        _
      %p233 = scmp.le.s32.totalorder 1, %s26
      %p234 = scmp.lt.s32.totalorder %s26, 6
      %p235 = pnand %p233, %p234
      %p236 = pneg %p235
      // Predicated region
      $region29: #{tpu_custom_call.1} parent=5 // pred_check
        _
      $region30: #{tpu_custom_call.1} parent=5 // pred_check_branch
        %238 = sbr.rel (%p235) target = $region32
      $region31: #{tpu_custom_call.1} parent=5 // pred_region
        %s239 = ssub.s32 %s26, 1
        %s240 = sand.u32 %s53, 1
        %s241 = scalar_lea.sflag [#allocation7], %s240
        %s242 = sand.u32 %s53, 1
        %s243 = smul.addr %s242, 512
        %s244 = scalar_lea.vmem [#allocation6], %s243
        // Predicated region
        $region33: #{tpu_custom_call.1} parent=31 // pred_check
          %p245 = pneg %p66
        $region34: #{tpu_custom_call.1} parent=31 // pred_check_branch
          %247 = sbr.rel (%p245) target = $region36
        $region35: #{tpu_custom_call.1} parent=31 // pred_region
          %248 = dma.done %s241, 8192
        $region36: #{tpu_custom_call.1} parent=31 // pred_fallthru
          _
        %s249 = sand.u32 %s31, 1
        %s250 = scalar_lea.sflag [#allocation10], %s249
        %s251 = sand.u32 %s83, 1
        %s252 = smul.addr %s251, 128
        %s253 = scalar_lea.vmem [#allocation9], %s252
        // Predicated region
        $region37: #{tpu_custom_call.1} parent=31 // pred_check
          %p254 = pneg %p96
        $region38: #{tpu_custom_call.1} parent=31 // pred_check_branch
          %256 = sbr.rel (%p254) target = $region40
        $region39: #{tpu_custom_call.1} parent=31 // pred_region
          %257 = dma.done %s250, 2048
        $region40: #{tpu_custom_call.1} parent=31 // pred_fallthru
          _
        %s258 = sand.u32 %s31, 1
        %s259 = scalar_lea.sflag [#allocation10], %s258
        %s260 = sand.u32 %s111, 1
        %s261 = scalar_lea.vmem [#allocation11], %s260
        // Predicated region
        $region41: #{tpu_custom_call.1} parent=31 // pred_check
          %p262 = pneg %p124
        $region42: #{tpu_custom_call.1} parent=31 // pred_check_branch
          %264 = sbr.rel (%p262) target = $region44
        $region43: #{tpu_custom_call.1} parent=31 // pred_region
          %265 = dma.done %s259, 16
        $region44: #{tpu_custom_call.1} parent=31 // pred_fallthru
          _
        %s266 = sand.u32 %s53, 1
        %s267 = scalar_lea.sflag [#allocation7], %s266
        %s268 = sand.u32 %s53, 1
        %s269 = smul.addr %s268, 512
        %s270 = scalar_lea.vmem [#allocation6], %s269
        %p271 = pneg %p66
        %p272 = pneg %p63
        %s273 = sand.u32 %s31, 1
        %s274 = scalar_lea.sflag [#allocation10], %s273
        %s275 = sand.u32 %s83, 1
        %s276 = smul.addr %s275, 128
        %s277 = scalar_lea.vmem [#allocation9], %s276
        %p278 = pneg %p96
        %p279 = pneg %p93
        %s280 = sand.u32 %s31, 1
        %s281 = scalar_lea.sflag [#allocation10], %s280
        %s282 = sand.u32 %s111, 1
        %s283 = scalar_lea.vmem [#allocation11], %s282
        %p284 = pneg %p124
        %p285 = pneg %p121
        %p286 = pneg %p150
        %p287 = pneg %p147
        %s288 = sand.u32 %s137, 1
        %s289 = scalar_lea.sflag [#allocation8], %s288
        %s290 = sand.u32 %s137, 1
        %s291 = smul.addr %s290, 512
        %s292 = scalar_lea.vmem [#allocation12], %s291
        %s293 = smul.u32 64, %s35
        %s294 = sld [smem:[#allocation4 + %s35]]
        %s295 = smul.u32 16, %s36
        %s296 = sld [smem:[#allocation4 + %s35]]
        %s297 = smul.u32 64, %s35
        %p298 = scmp.eq.s32.totalorder %s36, 0
        // Predicated region
        $region45: #{tpu_custom_call.1} parent=31 // pred_check
          %p299 = pneg %p298
        $region46: #{tpu_custom_call.1} parent=31 // pred_check_branch
          %301 = sbr.rel (%p299) target = $region48
        $region47: #{tpu_custom_call.1} parent=31 // pred_region
          %302 = vst [vmem:[#allocation2] sm:$0xff] 0.0
          %303 = vst [vmem:[#allocation2 + $0x8] sm:$0xff] 0.0
          %304 = vst [vmem:[#allocation2 + $0x10] sm:$0xff] 0.0
          %305 = vst [vmem:[#allocation2 + $0x18] sm:$0xff] 0.0
          %306 = vst [vmem:[#allocation2 + $0x20] sm:$0xff] 0.0
          %307 = vst [vmem:[#allocation2 + $0x28] sm:$0xff] 0.0
          %308 = vst [vmem:[#allocation2 + $0x30] sm:$0xff] 0.0
          %309 = vst [vmem:[#allocation2 + $0x38] sm:$0xff] 0.0
          %310 = vst [vmem:[#allocation2 + $0x40] sm:$0xff] 0.0
          %311 = vst [vmem:[#allocation2 + $0x48] sm:$0xff] 0.0
          %312 = vst [vmem:[#allocation2 + $0x50] sm:$0xff] 0.0
          %313 = vst [vmem:[#allocation2 + $0x58] sm:$0xff] 0.0
          %314 = vst [vmem:[#allocation2 + $0x60] sm:$0xff] 0.0
          %315 = vst [vmem:[#allocation2 + $0x68] sm:$0xff] 0.0
          %316 = vst [vmem:[#allocation2 + $0x70] sm:$0xff] 0.0
          %317 = vst [vmem:[#allocation2 + $0x78] sm:$0xff] 0.0
          %318 = vst [vmem:[#allocation2 + $0x80] sm:$0xff] 0.0
          %319 = vst [vmem:[#allocation2 + $0x88] sm:$0xff] 0.0
          %320 = vst [vmem:[#allocation2 + $0x90] sm:$0xff] 0.0
          %321 = vst [vmem:[#allocation2 + $0x98] sm:$0xff] 0.0
          %322 = vst [vmem:[#allocation2 + $0xa0] sm:$0xff] 0.0
          %323 = vst [vmem:[#allocation2 + $0xa8] sm:$0xff] 0.0
          %324 = vst [vmem:[#allocation2 + $0xb0] sm:$0xff] 0.0
          %325 = vst [vmem:[#allocation2 + $0xb8] sm:$0xff] 0.0
          %326 = vst [vmem:[#allocation2 + $0xc0] sm:$0xff] 0.0
          %327 = vst [vmem:[#allocation2 + $0xc8] sm:$0xff] 0.0
          %328 = vst [vmem:[#allocation2 + $0xd0] sm:$0xff] 0.0
          %329 = vst [vmem:[#allocation2 + $0xd8] sm:$0xff] 0.0
          %330 = vst [vmem:[#allocation2 + $0xe0] sm:$0xff] 0.0
          %331 = vst [vmem:[#allocation2 + $0xe8] sm:$0xff] 0.0
          %332 = vst [vmem:[#allocation2 + $0xf0] sm:$0xff] 0.0
          %333 = vst [vmem:[#allocation2 + $0xf8] sm:$0xff] 0.0
          %334 = vst [vmem:[#allocation2 + $0x100] sm:$0xff] 0.0
          %335 = vst [vmem:[#allocation2 + $0x108] sm:$0xff] 0.0
          %336 = vst [vmem:[#allocation2 + $0x110] sm:$0xff] 0.0
          %337 = vst [vmem:[#allocation2 + $0x118] sm:$0xff] 0.0
          %338 = vst [vmem:[#allocation2 + $0x120] sm:$0xff] 0.0
          %339 = vst [vmem:[#allocation2 + $0x128] sm:$0xff] 0.0
          %340 = vst [vmem:[#allocation2 + $0x130] sm:$0xff] 0.0
          %341 = vst [vmem:[#allocation2 + $0x138] sm:$0xff] 0.0
          %342 = vst [vmem:[#allocation2 + $0x140] sm:$0xff] 0.0
          %343 = vst [vmem:[#allocation2 + $0x148] sm:$0xff] 0.0
          %344 = vst [vmem:[#allocation2 + $0x150] sm:$0xff] 0.0
          %345 = vst [vmem:[#allocation2 + $0x158] sm:$0xff] 0.0
          %346 = vst [vmem:[#allocation2 + $0x160] sm:$0xff] 0.0
          %347 = vst [vmem:[#allocation2 + $0x168] sm:$0xff] 0.0
          %348 = vst [vmem:[#allocation2 + $0x170] sm:$0xff] 0.0
          %349 = vst [vmem:[#allocation2 + $0x178] sm:$0xff] 0.0
          %350 = vst [vmem:[#allocation2 + $0x180] sm:$0xff] 0.0
          %351 = vst [vmem:[#allocation2 + $0x188] sm:$0xff] 0.0
          %352 = vst [vmem:[#allocation2 + $0x190] sm:$0xff] 0.0
          %353 = vst [vmem:[#allocation2 + $0x198] sm:$0xff] 0.0
          %354 = vst [vmem:[#allocation2 + $0x1a0] sm:$0xff] 0.0
          %355 = vst [vmem:[#allocation2 + $0x1a8] sm:$0xff] 0.0
          %356 = vst [vmem:[#allocation2 + $0x1b0] sm:$0xff] 0.0
          %357 = vst [vmem:[#allocation2 + $0x1b8] sm:$0xff] 0.0
          %358 = vst [vmem:[#allocation2 + $0x1c0] sm:$0xff] 0.0
          %359 = vst [vmem:[#allocation2 + $0x1c8] sm:$0xff] 0.0
          %360 = vst [vmem:[#allocation2 + $0x1d0] sm:$0xff] 0.0
          %361 = vst [vmem:[#allocation2 + $0x1d8] sm:$0xff] 0.0
          %362 = vst [vmem:[#allocation2 + $0x1e0] sm:$0xff] 0.0
          %363 = vst [vmem:[#allocation2 + $0x1e8] sm:$0xff] 0.0
          %364 = vst [vmem:[#allocation2 + $0x1f0] sm:$0xff] 0.0
          %365 = vst [vmem:[#allocation2 + $0x1f8] sm:$0xff] 0.0
        $region48: #{tpu_custom_call.1} parent=31 // pred_fallthru
          _
        %s366 = sld [smem:[#allocation5 + %s35]]
        %p367 = scmp.gt.s32.totalorder %s366, 0
        // Predicated region
        $region49: #{tpu_custom_call.1} parent=31 // pred_check
          %p368 = pneg %p367
        $region50: #{tpu_custom_call.1} parent=31 // pred_check_branch
          %370 = sbr.rel (%p368) target = $region52
        $region51: #{tpu_custom_call.1} parent=31 // pred_region
          %v371 = vld [vmem:[#allocation2] sm:$0xff]
          %v372 = vld [vmem:[#allocation2 + $0x8] sm:$0xff]
          %v373 = vld [vmem:[#allocation2 + $0x10] sm:$0xff]
          %v374 = vld [vmem:[#allocation2 + $0x18] sm:$0xff]
          %v375 = vld [vmem:[#allocation2 + $0x20] sm:$0xff]
          %v376 = vld [vmem:[#allocation2 + $0x28] sm:$0xff]
          %v377 = vld [vmem:[#allocation2 + $0x30] sm:$0xff]
          %v378 = vld [vmem:[#allocation2 + $0x38] sm:$0xff]
          %v379 = vld [vmem:[#allocation2 + $0x40] sm:$0xff]
          %v380 = vld [vmem:[#allocation2 + $0x48] sm:$0xff]
          %v381 = vld [vmem:[#allocation2 + $0x50] sm:$0xff]
          %v382 = vld [vmem:[#allocation2 + $0x58] sm:$0xff]
          %v383 = vld [vmem:[#allocation2 + $0x60] sm:$0xff]
          %v384 = vld [vmem:[#allocation2 + $0x68] sm:$0xff]
          %v385 = vld [vmem:[#allocation2 + $0x70] sm:$0xff]
          %v386 = vld [vmem:[#allocation2 + $0x78] sm:$0xff]
          %v387 = vld [vmem:[#allocation2 + $0x80] sm:$0xff]
          %v388 = vld [vmem:[#allocation2 + $0x88] sm:$0xff]
          %v389 = vld [vmem:[#allocation2 + $0x90] sm:$0xff]
          %v390 = vld [vmem:[#allocation2 + $0x98] sm:$0xff]
          %v391 = vld [vmem:[#allocation2 + $0xa0] sm:$0xff]
          %v392 = vld [vmem:[#allocation2 + $0xa8] sm:$0xff]
          %v393 = vld [vmem:[#allocation2 + $0xb0] sm:$0xff]
          %v394 = vld [vmem:[#allocation2 + $0xb8] sm:$0xff]
          %v395 = vld [vmem:[#allocation2 + $0xc0] sm:$0xff]
          %v396 = vld [vmem:[#allocation2 + $0xc8] sm:$0xff]
          %v397 = vld [vmem:[#allocation2 + $0xd0] sm:$0xff]
          %v398 = vld [vmem:[#allocation2 + $0xd8] sm:$0xff]
          %v399 = vld [vmem:[#allocation2 + $0xe0] sm:$0xff]
          %v400 = vld [vmem:[#allocation2 + $0xe8] sm:$0xff]
          %v401 = vld [vmem:[#allocation2 + $0xf0] sm:$0xff]
          %v402 = vld [vmem:[#allocation2 + $0xf8] sm:$0xff]
          %v403 = vld [vmem:[#allocation2 + $0x100] sm:$0xff]
          %v404 = vld [vmem:[#allocation2 + $0x108] sm:$0xff]
          %v405 = vld [vmem:[#allocation2 + $0x110] sm:$0xff]
          %v406 = vld [vmem:[#allocation2 + $0x118] sm:$0xff]
          %v407 = vld [vmem:[#allocation2 + $0x120] sm:$0xff]
          %v408 = vld [vmem:[#allocation2 + $0x128] sm:$0xff]
          %v409 = vld [vmem:[#allocation2 + $0x130] sm:$0xff]
          %v410 = vld [vmem:[#allocation2 + $0x138] sm:$0xff]
          %v411 = vld [vmem:[#allocation2 + $0x140] sm:$0xff]
          %v412 = vld [vmem:[#allocation2 + $0x148] sm:$0xff]
          %v413 = vld [vmem:[#allocation2 + $0x150] sm:$0xff]
          %v414 = vld [vmem:[#allocation2 + $0x158] sm:$0xff]
          %v415 = vld [vmem:[#allocation2 + $0x160] sm:$0xff]
          %v416 = vld [vmem:[#allocation2 + $0x168] sm:$0xff]
          %v417 = vld [vmem:[#allocation2 + $0x170] sm:$0xff]
          %v418 = vld [vmem:[#allocation2 + $0x178] sm:$0xff]
          %v419 = vld [vmem:[#allocation2 + $0x180] sm:$0xff]
          %v420 = vld [vmem:[#allocation2 + $0x188] sm:$0xff]
          %v421 = vld [vmem:[#allocation2 + $0x190] sm:$0xff]
          %v422 = vld [vmem:[#allocation2 + $0x198] sm:$0xff]
          %v423 = vld [vmem:[#allocation2 + $0x1a0] sm:$0xff]
          %v424 = vld [vmem:[#allocation2 + $0x1a8] sm:$0xff]
          %v425 = vld [vmem:[#allocation2 + $0x1b0] sm:$0xff]
          %v426 = vld [vmem:[#allocation2 + $0x1b8] sm:$0xff]
          %v427 = vld [vmem:[#allocation2 + $0x1c0] sm:$0xff]
          %v428 = vld [vmem:[#allocation2 + $0x1c8] sm:$0xff]
          %v429 = vld [vmem:[#allocation2 + $0x1d0] sm:$0xff]
          %v430 = vld [vmem:[#allocation2 + $0x1d8] sm:$0xff]
          %v431 = vld [vmem:[#allocation2 + $0x1e0] sm:$0xff]
          %v432 = vld [vmem:[#allocation2 + $0x1e8] sm:$0xff]
          %v433 = vld [vmem:[#allocation2 + $0x1f0] sm:$0xff]
          %v434 = vld [vmem:[#allocation2 + $0x1f8] sm:$0xff]
          %v435 = vld [vmem:[%s244] sm:$0xff]
          %v436 = vld [vmem:[%s244 + $0x8] sm:$0xff]
          %v437 = vld [vmem:[%s244 + $0x10] sm:$0xff]
          %v438 = vld [vmem:[%s244 + $0x18] sm:$0xff]
          %v439 = vld [vmem:[%s244 + $0x20] sm:$0xff]
          %v440 = vld [vmem:[%s244 + $0x28] sm:$0xff]
          %v441 = vld [vmem:[%s244 + $0x30] sm:$0xff]
          %v442 = vld [vmem:[%s244 + $0x38] sm:$0xff]
          %v443 = vld [vmem:[%s244 + $0x40] sm:$0xff]
          %v444 = vld [vmem:[%s244 + $0x48] sm:$0xff]
          %v445 = vld [vmem:[%s244 + $0x50] sm:$0xff]
          %v446 = vld [vmem:[%s244 + $0x58] sm:$0xff]
          %v447 = vld [vmem:[%s244 + $0x60] sm:$0xff]
          %v448 = vld [vmem:[%s244 + $0x68] sm:$0xff]
          %v449 = vld [vmem:[%s244 + $0x70] sm:$0xff]
          %v450 = vld [vmem:[%s244 + $0x78] sm:$0xff]
          %v451 = vld [vmem:[%s244 + $0x80] sm:$0xff]
          %v452 = vld [vmem:[%s244 + $0x88] sm:$0xff]
          %v453 = vld [vmem:[%s244 + $0x90] sm:$0xff]
          %v454 = vld [vmem:[%s244 + $0x98] sm:$0xff]
          %v455 = vld [vmem:[%s244 + $0xa0] sm:$0xff]
          %v456 = vld [vmem:[%s244 + $0xa8] sm:$0xff]
          %v457 = vld [vmem:[%s244 + $0xb0] sm:$0xff]
          %v458 = vld [vmem:[%s244 + $0xb8] sm:$0xff]
          %v459 = vld [vmem:[%s244 + $0xc0] sm:$0xff]
          %v460 = vld [vmem:[%s244 + $0xc8] sm:$0xff]
          %v461 = vld [vmem:[%s244 + $0xd0] sm:$0xff]
          %v462 = vld [vmem:[%s244 + $0xd8] sm:$0xff]
          %v463 = vld [vmem:[%s244 + $0xe0] sm:$0xff]
          %v464 = vld [vmem:[%s244 + $0xe8] sm:$0xff]
          %v465 = vld [vmem:[%s244 + $0xf0] sm:$0xff]
          %v466 = vld [vmem:[%s244 + $0xf8] sm:$0xff]
          %v467 = vld [vmem:[%s244 + $0x100] sm:$0xff]
          %v468 = vld [vmem:[%s244 + $0x108] sm:$0xff]
          %v469 = vld [vmem:[%s244 + $0x110] sm:$0xff]
          %v470 = vld [vmem:[%s244 + $0x118] sm:$0xff]
          %v471 = vld [vmem:[%s244 + $0x120] sm:$0xff]
          %v472 = vld [vmem:[%s244 + $0x128] sm:$0xff]
          %v473 = vld [vmem:[%s244 + $0x130] sm:$0xff]
          %v474 = vld [vmem:[%s244 + $0x138] sm:$0xff]
          %v475 = vld [vmem:[%s244 + $0x140] sm:$0xff]
          %v476 = vld [vmem:[%s244 + $0x148] sm:$0xff]
          %v477 = vld [vmem:[%s244 + $0x150] sm:$0xff]
          %v478 = vld [vmem:[%s244 + $0x158] sm:$0xff]
          %v479 = vld [vmem:[%s244 + $0x160] sm:$0xff]
          %v480 = vld [vmem:[%s244 + $0x168] sm:$0xff]
          %v481 = vld [vmem:[%s244 + $0x170] sm:$0xff]
          %v482 = vld [vmem:[%s244 + $0x178] sm:$0xff]
          %v483 = vld [vmem:[%s244 + $0x180] sm:$0xff]
          %v484 = vld [vmem:[%s244 + $0x188] sm:$0xff]
          %v485 = vld [vmem:[%s244 + $0x190] sm:$0xff]
          %v486 = vld [vmem:[%s244 + $0x198] sm:$0xff]
          %v487 = vld [vmem:[%s244 + $0x1a0] sm:$0xff]
          %v488 = vld [vmem:[%s244 + $0x1a8] sm:$0xff]
          %v489 = vld [vmem:[%s244 + $0x1b0] sm:$0xff]
          %v490 = vld [vmem:[%s244 + $0x1b8] sm:$0xff]
          %v491 = vld [vmem:[%s244 + $0x1c0] sm:$0xff]
          %v492 = vld [vmem:[%s244 + $0x1c8] sm:$0xff]
          %v493 = vld [vmem:[%s244 + $0x1d0] sm:$0xff]
          %v494 = vld [vmem:[%s244 + $0x1d8] sm:$0xff]
          %v495 = vld [vmem:[%s244 + $0x1e0] sm:$0xff]
          %v496 = vld [vmem:[%s244 + $0x1e8] sm:$0xff]
          %v497 = vld [vmem:[%s244 + $0x1f0] sm:$0xff]
          %v498 = vld [vmem:[%s244 + $0x1f8] sm:$0xff]
          %v499 = vld [vmem:[%s253] sm:$0xff]
          %v500 = vld [vmem:[%s253 + $0x8] sm:$0xff]
          %v501 = vld [vmem:[%s253 + $0x10] sm:$0xff]
          %v502 = vld [vmem:[%s253 + $0x18] sm:$0xff]
          %v503 = vld [vmem:[%s253 + $0x20] sm:$0xff]
          %v504 = vld [vmem:[%s253 + $0x28] sm:$0xff]
          %v505 = vld [vmem:[%s253 + $0x30] sm:$0xff]
          %v506 = vld [vmem:[%s253 + $0x38] sm:$0xff]
          %v507 = vld [vmem:[%s253 + $0x40] sm:$0xff]
          %v508 = vld [vmem:[%s253 + $0x48] sm:$0xff]
          %v509 = vld [vmem:[%s253 + $0x50] sm:$0xff]
          %v510 = vld [vmem:[%s253 + $0x58] sm:$0xff]
          %v511 = vld [vmem:[%s253 + $0x60] sm:$0xff]
          %v512 = vld [vmem:[%s253 + $0x68] sm:$0xff]
          %v513 = vld [vmem:[%s253 + $0x70] sm:$0xff]
          %v514 = vld [vmem:[%s253 + $0x78] sm:$0xff]
          %515 = vmatprep.subr.mxu0 0.0
          %516 = vmatpush1.msra.mxu0 %v499
          %517 = vmatprep.subr.mxu0 0.0
          %518 = vmatpush1.msra.mxu0 %v500
          %519 = vmatprep.subr.mxu0 0.0
          %520 = vmatpush1.msra.mxu0 %v501
          %521 = vmatprep.subr.mxu0 0.0
          %522 = vmatpush1.msra.mxu0 %v502
          %523 = vmatprep.subr.mxu0 0.0
          %524 = vmatpush1.msra.mxu0 %v503
          %525 = vmatprep.subr.mxu0 0.0
          %526 = vmatpush1.msra.mxu0 %v504
          %527 = vmatprep.subr.mxu0 0.0
          %528 = vmatpush1.msra.mxu0 %v505
          %529 = vmatprep.subr.mxu0 0.0
          %530 = vmatpush1.msra.mxu0 %v506
          %531 = vmatprep.subr.mxu0 0.0
          %532 = vmatpush1.msra.mxu0 %v507
          %533 = vmatprep.subr.mxu0 0.0
          %534 = vmatpush1.msra.mxu0 %v508
          %535 = vmatprep.subr.mxu0 0.0
          %536 = vmatpush1.msra.mxu0 %v509
          %537 = vmatprep.subr.mxu0 0.0
          %538 = vmatpush1.msra.mxu0 %v510
          %539 = vmatprep.subr.mxu0 0.0
          %540 = vmatpush1.msra.mxu0 %v511
          %541 = vmatprep.subr.mxu0 0.0
          %542 = vmatpush1.msra.mxu0 %v512
          %543 = vmatprep.subr.mxu0 0.0
          %544 = vmatpush1.msra.mxu0 %v513
          %545 = vmatprep.subr.mxu0 0.0
          %546 = vmatpush1.msra.mxu0 %v514
          %547 = vmatprep.subr.mxu0 0.0
          %548 = vmatpush1.msra.mxu0 0.0
          %549 = vmatprep.subr.mxu0 0.0
          %550 = vmatpush1.msra.mxu0 0.0
          %551 = vmatprep.subr.mxu0 0.0
          %552 = vmatpush1.msra.mxu0 0.0
          %553 = vmatprep.subr.mxu0 0.0
          %554 = vmatpush1.msra.mxu0 0.0
          %555 = vmatprep.subr.mxu0 0.0
          %556 = vmatpush1.msra.mxu0 0.0
          %557 = vmatprep.subr.mxu0 0.0
          %558 = vmatpush1.msra.mxu0 0.0
          %559 = vmatprep.subr.mxu0 0.0
          %560 = vmatpush1.msra.mxu0 0.0
          %561 = vmatprep.subr.mxu0 0.0
          %562 = vmatpush1.msra.mxu0 0.0
          %563 = vmatprep.subr.mxu0 0.0
          %564 = vmatpush1.msra.mxu0 0.0
          %565 = vmatprep.subr.mxu0 0.0
          %566 = vmatpush1.msra.mxu0 0.0
          %567 = vmatprep.subr.mxu0 0.0
          %568 = vmatpush1.msra.mxu0 0.0
          %569 = vmatprep.subr.mxu0 0.0
          %570 = vmatpush1.msra.mxu0 0.0
          %571 = vmatprep.subr.mxu0 0.0
          %572 = vmatpush1.msra.mxu0 0.0
          %573 = vmatprep.subr.mxu0 0.0
          %574 = vmatpush1.msra.mxu0 0.0
          %575 = vmatprep.subr.mxu0 0.0
          %576 = vmatpush1.msra.mxu0 0.0
          %577 = vmatprep.subr.mxu0 0.0
          %578 = vmatpush1.msra.mxu0 0.0
          %579 = vmatprep.mubr.f32.mxu0 0.0
          %580 = vmatmul.mubr.f32.gmra.mrb[0].mxu0 %v435
          %v581 = vpop.f32.mrb[0].mxu0
          %v582 = vadd.f32 0.0, %v581
          %v583 = vpop.f32.mrb[0].mxu0
          %584 = vmatprep.mubr.f32.mxu0 0.0
          %585 = vmatmul.mubr.f32.gmra.mrb[0].mxu0 %v436
          %v586 = vpop.f32.mrb[0].mxu0
          %v587 = vadd.f32 0.0, %v586
          %v588 = vpop.f32.mrb[0].mxu0
          %589 = vmatprep.mubr.f32.mxu0 0.0
          %590 = vmatmul.mubr.f32.gmra.mrb[0].mxu0 %v437
          %v591 = vpop.f32.mrb[0].mxu0
          %v592 = vadd.f32 0.0, %v591
          %v593 = vpop.f32.mrb[0].mxu0
          %594 = vmatprep.mubr.f32.mxu0 0.0
          %595 = vmatmul.mubr.f32.gmra.mrb[0].mxu0 %v438
          %v596 = vpop.f32.mrb[0].mxu0
          %v597 = vadd.f32 0.0, %v596
          %v598 = vpop.f32.mrb[0].mxu0
          %599 = vmatprep.mubr.f32.mxu0 0.0
          %600 = vmatmul.mubr.f32.gmra.mrb[0].mxu0 %v439
          %v601 = vpop.f32.mrb[0].mxu0
          %v602 = vadd.f32 0.0, %v601
          %v603 = vpop.f32.mrb[0].mxu0
          %604 = vmatprep.mubr.f32.mxu0 0.0
          %605 = vmatmul.mubr.f32.gmra.mrb[0].mxu0 %v440
          %v606 = vpop.f32.mrb[0].mxu0
          %v607 = vadd.f32 0.0, %v606
          %v608 = vpop.f32.mrb[0].mxu0
          %609 = vmatprep.mubr.f32.mxu0 0.0
          %610 = vmatmul.mubr.f32.gmra.mrb[0].mxu0 %v441
          %v611 = vpop.f32.mrb[0].mxu0
          %v612 = vadd.f32 0.0, %v611
          %v613 = vpop.f32.mrb[0].mxu0
          %614 = vmatprep.mubr.f32.mxu0 0.0
          %615 = vmatmul.mubr.f32.gmra.mrb[0].mxu0 %v442
          %v616 = vpop.f32.mrb[0].mxu0
          %v617 = vadd.f32 0.0, %v616
          %v618 = vpop.f32.mrb[0].mxu0
          %619 = vmatprep.mubr.f32.mxu0 0.0
          %620 = vmatmul.mubr.f32.gmra.mrb[0].mxu0 %v443
          %v621 = vpop.f32.mrb[0].mxu0
          %v622 = vadd.f32 0.0, %v621
          %v623 = vpop.f32.mrb[0].mxu0
          %624 = vmatprep.mubr.f32.mxu0 0.0
          %625 = vmatmul.mubr.f32.gmra.mrb[0].mxu0 %v444
          %v626 = vpop.f32.mrb[0].mxu0
          %v627 = vadd.f32 0.0, %v626
          %v628 = vpop.f32.mrb[0].mxu0
          %629 = vmatprep.mubr.f32.mxu0 0.0
          %630 = vmatmul.mubr.f32.gmra.mrb[0].mxu0 %v445
          %v631 = vpop.f32.mrb[0].mxu0
          %v632 = vadd.f32 0.0, %v631
          %v633 = vpop.f32.mrb[0].mxu0
          %634 = vmatprep.mubr.f32.mxu0 0.0
          %635 = vmatmul.mubr.f32.gmra.mrb[0].mxu0 %v446
          %v636 = vpop.f32.mrb[0].mxu0
          %v637 = vadd.f32 0.0, %v636
          %v638 = vpop.f32.mrb[0].mxu0
          %639 = vmatprep.mubr.f32.mxu0 0.0
          %640 = vmatmul.mubr.f32.gmra.mrb[0].mxu0 %v447
          %v641 = vpop.f32.mrb[0].mxu0
          %v642 = vadd.f32 0.0, %v641
          %v643 = vpop.f32.mrb[0].mxu0
          %644 = vmatprep.mubr.f32.mxu0 0.0
          %645 = vmatmul.mubr.f32.gmra.mrb[0].mxu0 %v448
          %v646 = vpop.f32.mrb[0].mxu0
          %v647 = vadd.f32 0.0, %v646
          %v648 = vpop.f32.mrb[0].mxu0
          %649 = vmatprep.mubr.f32.mxu0 0.0
          %650 = vmatmul.mubr.f32.gmra.mrb[0].mxu0 %v449
          %v651 = vpop.f32.mrb[0].mxu0
          %v652 = vadd.f32 0.0, %v651
          %v653 = vpop.f32.mrb[0].mxu0
          %654 = vmatprep.mubr.f32.mxu0 0.0
          %655 = vmatmul.mubr.f32.gmra.mrb[0].mxu0 %v450
          %v656 = vpop.f32.mrb[0].mxu0
          %v657 = vadd.f32 0.0, %v656
          %v658 = vpop.f32.mrb[0].mxu0
          %659 = vmatprep.mubr.f32.mxu0 0.0
          %660 = vmatmul.mubr.f32.gmra.mrb[0].mxu0 %v451
          %v661 = vpop.f32.mrb[0].mxu0
          %v662 = vadd.f32 0.0, %v661
          %v663 = vpop.f32.mrb[0].mxu0
          %664 = vmatprep.mubr.f32.mxu0 0.0
          %665 = vmatmul.mubr.f32.gmra.mrb[0].mxu0 %v452
          %v666 = vpop.f32.mrb[0].mxu0
          %v667 = vadd.f32 0.0, %v666
          %v668 = vpop.f32.mrb[0].mxu0
          %669 = vmatprep.mubr.f32.mxu0 0.0
          %670 = vmatmul.mubr.f32.gmra.mrb[0].mxu0 %v453
          %v671 = vpop.f32.mrb[0].mxu0
          %v672 = vadd.f32 0.0, %v671
          %v673 = vpop.f32.mrb[0].mxu0
          %674 = vmatprep.mubr.f32.mxu0 0.0
          %675 = vmatmul.mubr.f32.gmra.mrb[0].mxu0 %v454
          %v676 = vpop.f32.mrb[0].mxu0
          %v677 = vadd.f32 0.0, %v676
          %v678 = vpop.f32.mrb[0].mxu0
          %679 = vmatprep.mubr.f32.mxu0 0.0
          %680 = vmatmul.mubr.f32.gmra.mrb[0].mxu0 %v455
          %v681 = vpop.f32.mrb[0].mxu0
          %v682 = vadd.f32 0.0, %v681
          %v683 = vpop.f32.mrb[0].mxu0
          %684 = vmatprep.mubr.f32.mxu0 0.0
          %685 = vmatmul.mubr.f32.gmra.mrb[0].mxu0 %v456
          %v686 = vpop.f32.mrb[0].mxu0
          %v687 = vadd.f32 0.0, %v686
          %v688 = vpop.f32.mrb[0].mxu0
          %689 = vmatprep.mubr.f32.mxu0 0.0
          %690 = vmatmul.mubr.f32.gmra.mrb[0].mxu0 %v457
          %v691 = vpop.f32.mrb[0].mxu0
          %v692 = vadd.f32 0.0, %v691
          %v693 = vpop.f32.mrb[0].mxu0
          %694 = vmatprep.mubr.f32.mxu0 0.0
          %695 = vmatmul.mubr.f32.gmra.mrb[0].mxu0 %v458
          %v696 = vpop.f32.mrb[0].mxu0
          %v697 = vadd.f32 0.0, %v696
          %v698 = vpop.f32.mrb[0].mxu0
          %699 = vmatprep.mubr.f32.mxu0 0.0
          %700 = vmatmul.mubr.f32.gmra.mrb[0].mxu0 %v459
          %v701 = vpop.f32.mrb[0].mxu0
          %v702 = vadd.f32 0.0, %v701
          %v703 = vpop.f32.mrb[0].mxu0
          %704 = vmatprep.mubr.f32.mxu0 0.0
          %705 = vmatmul.mubr.f32.gmra.mrb[0].mxu0 %v460
          %v706 = vpop.f32.mrb[0].mxu0
          %v707 = vadd.f32 0.0, %v706
          %v708 = vpop.f32.mrb[0].mxu0
          %709 = vmatprep.mubr.f32.mxu0 0.0
          %710 = vmatmul.mubr.f32.gmra.mrb[0].mxu0 %v461
          %v711 = vpop.f32.mrb[0].mxu0
          %v712 = vadd.f32 0.0, %v711
          %v713 = vpop.f32.mrb[0].mxu0
          %714 = vmatprep.mubr.f32.mxu0 0.0
          %715 = vmatmul.mubr.f32.gmra.mrb[0].mxu0 %v462
          %v716 = vpop.f32.mrb[0].mxu0
          %v717 = vadd.f32 0.0, %v716
          %v718 = vpop.f32.mrb[0].mxu0
          %719 = vmatprep.mubr.f32.mxu0 0.0
          %720 = vmatmul.mubr.f32.gmra.mrb[0].mxu0 %v463
          %v721 = vpop.f32.mrb[0].mxu0
          %v722 = vadd.f32 0.0, %v721
          %v723 = vpop.f32.mrb[0].mxu0
          %724 = vmatprep.mubr.f32.mxu0 0.0
          %725 = vmatmul.mubr.f32.gmra.mrb[0].mxu0 %v464
          %v726 = vpop.f32.mrb[0].mxu0
          %v727 = vadd.f32 0.0, %v726
          %v728 = vpop.f32.mrb[0].mxu0
          %729 = vmatprep.mubr.f32.mxu0 0.0
          %730 = vmatmul.mubr.f32.gmra.mrb[0].mxu0 %v465
          %v731 = vpop.f32.mrb[0].mxu0
          %v732 = vadd.f32 0.0, %v731
          %v733 = vpop.f32.mrb[0].mxu0
          %734 = vmatprep.mubr.f32.mxu0 0.0
          %735 = vmatmul.mubr.f32.gmra.mrb[0].mxu0 %v466
          %v736 = vpop.f32.mrb[0].mxu0
          %v737 = vadd.f32 0.0, %v736
          %v738 = vpop.f32.mrb[0].mxu0
          %739 = vmatprep.mubr.f32.mxu0 0.0
          %740 = vmatmul.mubr.f32.gmra.mrb[0].mxu0 %v467
          %v741 = vpop.f32.mrb[0].mxu0
          %v742 = vadd.f32 0.0, %v741
          %v743 = vpop.f32.mrb[0].mxu0
          %744 = vmatprep.mubr.f32.mxu0 0.0
          %745 = vmatmul.mubr.f32.gmra.mrb[0].mxu0 %v468
          %v746 = vpop.f32.mrb[0].mxu0
          %v747 = vadd.f32 0.0, %v746
          %v748 = vpop.f32.mrb[0].mxu0
          %749 = vmatprep.mubr.f32.mxu0 0.0
          %750 = vmatmul.mubr.f32.gmra.mrb[0].mxu0 %v469
          %v751 = vpop.f32.mrb[0].mxu0
          %v752 = vadd.f32 0.0, %v751
          %v753 = vpop.f32.mrb[0].mxu0
          %754 = vmatprep.mubr.f32.mxu0 0.0
          %755 = vmatmul.mubr.f32.gmra.mrb[0].mxu0 %v470
          %v756 = vpop.f32.mrb[0].mxu0
          %v757 = vadd.f32 0.0, %v756
          %v758 = vpop.f32.mrb[0].mxu0
          %759 = vmatprep.mubr.f32.mxu0 0.0
          %760 = vmatmul.mubr.f32.gmra.mrb[0].mxu0 %v471
          %v761 = vpop.f32.mrb[0].mxu0
          %v762 = vadd.f32 0.0, %v761
          %v763 = vpop.f32.mrb[0].mxu0
          %764 = vmatprep.mubr.f32.mxu0 0.0
          %765 = vmatmul.mubr.f32.gmra.mrb[0].mxu0 %v472
          %v766 = vpop.f32.mrb[0].mxu0
          %v767 = vadd.f32 0.0, %v766
          %v768 = vpop.f32.mrb[0].mxu0
          %769 = vmatprep.mubr.f32.mxu0 0.0
          %770 = vmatmul.mubr.f32.gmra.mrb[0].mxu0 %v473
          %v771 = vpop.f32.mrb[0].mxu0
          %v772 = vadd.f32 0.0, %v771
          %v773 = vpop.f32.mrb[0].mxu0
          %774 = vmatprep.mubr.f32.mxu0 0.0
          %775 = vmatmul.mubr.f32.gmra.mrb[0].mxu0 %v474
          %v776 = vpop.f32.mrb[0].mxu0
          %v777 = vadd.f32 0.0, %v776
          %v778 = vpop.f32.mrb[0].mxu0
          %779 = vmatprep.mubr.f32.mxu0 0.0
          %780 = vmatmul.mubr.f32.gmra.mrb[0].mxu0 %v475
          %v781 = vpop.f32.mrb[0].mxu0
          %v782 = vadd.f32 0.0, %v781
          %v783 = vpop.f32.mrb[0].mxu0
          %784 = vmatprep.mubr.f32.mxu0 0.0
          %785 = vmatmul.mubr.f32.gmra.mrb[0].mxu0 %v476
          %v786 = vpop.f32.mrb[0].mxu0
          %v787 = vadd.f32 0.0, %v786
          %v788 = vpop.f32.mrb[0].mxu0
          %789 = vmatprep.mubr.f32.mxu0 0.0
          %790 = vmatmul.mubr.f32.gmra.mrb[0].mxu0 %v477
          %v791 = vpop.f32.mrb[0].mxu0
          %v792 = vadd.f32 0.0, %v791
          %v793 = vpop.f32.mrb[0].mxu0
          %794 = vmatprep.mubr.f32.mxu0 0.0
          %795 = vmatmul.mubr.f32.gmra.mrb[0].mxu0 %v478
          %v796 = vpop.f32.mrb[0].mxu0
          %v797 = vadd.f32 0.0, %v796
          %v798 = vpop.f32.mrb[0].mxu0
          %799 = vmatprep.mubr.f32.mxu0 0.0
          %800 = vmatmul.mubr.f32.gmra.mrb[0].mxu0 %v479
          %v801 = vpop.f32.mrb[0].mxu0
          %v802 = vadd.f32 0.0, %v801
          %v803 = vpop.f32.mrb[0].mxu0
          %804 = vmatprep.mubr.f32.mxu0 0.0
          %805 = vmatmul.mubr.f32.gmra.mrb[0].mxu0 %v480
          %v806 = vpop.f32.mrb[0].mxu0
          %v807 = vadd.f32 0.0, %v806
          %v808 = vpop.f32.mrb[0].mxu0
          %809 = vmatprep.mubr.f32.mxu0 0.0
          %810 = vmatmul.mubr.f32.gmra.mrb[0].mxu0 %v481
          %v811 = vpop.f32.mrb[0].mxu0
          %v812 = vadd.f32 0.0, %v811
          %v813 = vpop.f32.mrb[0].mxu0
          %814 = vmatprep.mubr.f32.mxu0 0.0
          %815 = vmatmul.mubr.f32.gmra.mrb[0].mxu0 %v482
          %v816 = vpop.f32.mrb[0].mxu0
          %v817 = vadd.f32 0.0, %v816
          %v818 = vpop.f32.mrb[0].mxu0
          %819 = vmatprep.mubr.f32.mxu0 0.0
          %820 = vmatmul.mubr.f32.gmra.mrb[0].mxu0 %v483
          %v821 = vpop.f32.mrb[0].mxu0
          %v822 = vadd.f32 0.0, %v821
          %v823 = vpop.f32.mrb[0].mxu0
          %824 = vmatprep.mubr.f32.mxu0 0.0
          %825 = vmatmul.mubr.f32.gmra.mrb[0].mxu0 %v484
          %v826 = vpop.f32.mrb[0].mxu0
          %v827 = vadd.f32 0.0, %v826
          %v828 = vpop.f32.mrb[0].mxu0
          %829 = vmatprep.mubr.f32.mxu0 0.0
          %830 = vmatmul.mubr.f32.gmra.mrb[0].mxu0 %v485
          %v831 = vpop.f32.mrb[0].mxu0
          %v832 = vadd.f32 0.0, %v831
          %v833 = vpop.f32.mrb[0].mxu0
          %834 = vmatprep.mubr.f32.mxu0 0.0
          %835 = vmatmul.mubr.f32.gmra.mrb[0].mxu0 %v486
          %v836 = vpop.f32.mrb[0].mxu0
          %v837 = vadd.f32 0.0, %v836
          %v838 = vpop.f32.mrb[0].mxu0
          %839 = vmatprep.mubr.f32.mxu0 0.0
          %840 = vmatmul.mubr.f32.gmra.mrb[0].mxu0 %v487
          %v841 = vpop.f32.mrb[0].mxu0
          %v842 = vadd.f32 0.0, %v841
          %v843 = vpop.f32.mrb[0].mxu0
          %844 = vmatprep.mubr.f32.mxu0 0.0
          %845 = vmatmul.mubr.f32.gmra.mrb[0].mxu0 %v488
          %v846 = vpop.f32.mrb[0].mxu0
          %v847 = vadd.f32 0.0, %v846
          %v848 = vpop.f32.mrb[0].mxu0
          %849 = vmatprep.mubr.f32.mxu0 0.0
          %850 = vmatmul.mubr.f32.gmra.mrb[0].mxu0 %v489
          %v851 = vpop.f32.mrb[0].mxu0
          %v852 = vadd.f32 0.0, %v851
          %v853 = vpop.f32.mrb[0].mxu0
          %854 = vmatprep.mubr.f32.mxu0 0.0
          %855 = vmatmul.mubr.f32.gmra.mrb[0].mxu0 %v490
          %v856 = vpop.f32.mrb[0].mxu0
          %v857 = vadd.f32 0.0, %v856
          %v858 = vpop.f32.mrb[0].mxu0
          %859 = vmatprep.mubr.f32.mxu0 0.0
          %860 = vmatmul.mubr.f32.gmra.mrb[0].mxu0 %v491
          %v861 = vpop.f32.mrb[0].mxu0
          %v862 = vadd.f32 0.0, %v861
          %v863 = vpop.f32.mrb[0].mxu0
          %864 = vmatprep.mubr.f32.mxu0 0.0
          %865 = vmatmul.mubr.f32.gmra.mrb[0].mxu0 %v492
          %v866 = vpop.f32.mrb[0].mxu0
          %v867 = vadd.f32 0.0, %v866
          %v868 = vpop.f32.mrb[0].mxu0
          %869 = vmatprep.mubr.f32.mxu0 0.0
          %870 = vmatmul.mubr.f32.gmra.mrb[0].mxu0 %v493
          %v871 = vpop.f32.mrb[0].mxu0
          %v872 = vadd.f32 0.0, %v871
          %v873 = vpop.f32.mrb[0].mxu0
          %874 = vmatprep.mubr.f32.mxu0 0.0
          %875 = vmatmul.mubr.f32.gmra.mrb[0].mxu0 %v494
          %v876 = vpop.f32.mrb[0].mxu0
          %v877 = vadd.f32 0.0, %v876
          %v878 = vpop.f32.mrb[0].mxu0
          %879 = vmatprep.mubr.f32.mxu0 0.0
          %880 = vmatmul.mubr.f32.gmra.mrb[0].mxu0 %v495
          %v881 = vpop.f32.mrb[0].mxu0
          %v882 = vadd.f32 0.0, %v881
          %v883 = vpop.f32.mrb[0].mxu0
          %884 = vmatprep.mubr.f32.mxu0 0.0
          %885 = vmatmul.mubr.f32.gmra.mrb[0].mxu0 %v496
          %v886 = vpop.f32.mrb[0].mxu0
          %v887 = vadd.f32 0.0, %v886
          %v888 = vpop.f32.mrb[0].mxu0
          %889 = vmatprep.mubr.f32.mxu0 0.0
          %890 = vmatmul.mubr.f32.gmra.mrb[0].mxu0 %v497
          %v891 = vpop.f32.mrb[0].mxu0
          %v892 = vadd.f32 0.0, %v891
          %v893 = vpop.f32.mrb[0].mxu0
          %894 = vmatprep.mubr.f32.mxu0 0.0
          %895 = vmatmul.mubr.f32.gmra.mrb[0].mxu0 %v498
          %v896 = vpop.f32.mrb[0].mxu0
          %v897 = vadd.f32 0.0, %v896
          %v898 = vpop.f32.mrb[0].mxu0
          %899 = vdwg.mxu0
          %v900 = vadd.f32 %v371, %v582
          %v901 = vadd.f32 %v372, %v587
          %v902 = vadd.f32 %v373, %v592
          %v903 = vadd.f32 %v374, %v597
          %v904 = vadd.f32 %v375, %v602
          %v905 = vadd.f32 %v376, %v607
          %v906 = vadd.f32 %v377, %v612
          %v907 = vadd.f32 %v378, %v617
          %v908 = vadd.f32 %v379, %v622
          %v909 = vadd.f32 %v380, %v627
          %v910 = vadd.f32 %v381, %v632
          %v911 = vadd.f32 %v382, %v637
          %v912 = vadd.f32 %v383, %v642
          %v913 = vadd.f32 %v384, %v647
          %v914 = vadd.f32 %v385, %v652
          %v915 = vadd.f32 %v386, %v657
          %v916 = vadd.f32 %v387, %v662
          %v917 = vadd.f32 %v388, %v667
          %v918 = vadd.f32 %v389, %v672
          %v919 = vadd.f32 %v390, %v677
          %v920 = vadd.f32 %v391, %v682
          %v921 = vadd.f32 %v392, %v687
          %v922 = vadd.f32 %v393, %v692
          %v923 = vadd.f32 %v394, %v697
          %v924 = vadd.f32 %v395, %v702
          %v925 = vadd.f32 %v396, %v707
          %v926 = vadd.f32 %v397, %v712
          %v927 = vadd.f32 %v398, %v717
          %v928 = vadd.f32 %v399, %v722
          %v929 = vadd.f32 %v400, %v727
          %v930 = vadd.f32 %v401, %v732
          %v931 = vadd.f32 %v402, %v737
          %v932 = vadd.f32 %v403, %v742
          %v933 = vadd.f32 %v404, %v747
          %v934 = vadd.f32 %v405, %v752
          %v935 = vadd.f32 %v406, %v757
          %v936 = vadd.f32 %v407, %v762
          %v937 = vadd.f32 %v408, %v767
          %v938 = vadd.f32 %v409, %v772
          %v939 = vadd.f32 %v410, %v777
          %v940 = vadd.f32 %v411, %v782
          %v941 = vadd.f32 %v412, %v787
          %v942 = vadd.f32 %v413, %v792
          %v943 = vadd.f32 %v414, %v797
          %v944 = vadd.f32 %v415, %v802
          %v945 = vadd.f32 %v416, %v807
          %v946 = vadd.f32 %v417, %v812
          %v947 = vadd.f32 %v418, %v817
          %v948 = vadd.f32 %v419, %v822
          %v949 = vadd.f32 %v420, %v827
          %v950 = vadd.f32 %v421, %v832
          %v951 = vadd.f32 %v422, %v837
          %v952 = vadd.f32 %v423, %v842
          %v953 = vadd.f32 %v424, %v847
          %v954 = vadd.f32 %v425, %v852
          %v955 = vadd.f32 %v426, %v857
          %v956 = vadd.f32 %v427, %v862
          %v957 = vadd.f32 %v428, %v867
          %v958 = vadd.f32 %v429, %v872
          %v959 = vadd.f32 %v430, %v877
          %v960 = vadd.f32 %v431, %v882
          %v961 = vadd.f32 %v432, %v887
          %v962 = vadd.f32 %v433, %v892
          %v963 = vadd.f32 %v434, %v897
          %964 = vst [vmem:[#allocation2] sm:$0xff] %v900
          %965 = vst [vmem:[#allocation2 + $0x8] sm:$0xff] %v901
          %966 = vst [vmem:[#allocation2 + $0x10] sm:$0xff] %v902
          %967 = vst [vmem:[#allocation2 + $0x18] sm:$0xff] %v903
          %968 = vst [vmem:[#allocation2 + $0x20] sm:$0xff] %v904
          %969 = vst [vmem:[#allocation2 + $0x28] sm:$0xff] %v905
          %970 = vst [vmem:[#allocation2 + $0x30] sm:$0xff] %v906
          %971 = vst [vmem:[#allocation2 + $0x38] sm:$0xff] %v907
          %972 = vst [vmem:[#allocation2 + $0x40] sm:$0xff] %v908
          %973 = vst [vmem:[#allocation2 + $0x48] sm:$0xff] %v909
          %974 = vst [vmem:[#allocation2 + $0x50] sm:$0xff] %v910
          %975 = vst [vmem:[#allocation2 + $0x58] sm:$0xff] %v911
          %976 = vst [vmem:[#allocation2 + $0x60] sm:$0xff] %v912
          %977 = vst [vmem:[#allocation2 + $0x68] sm:$0xff] %v913
          %978 = vst [vmem:[#allocation2 + $0x70] sm:$0xff] %v914
          %979 = vst [vmem:[#allocation2 + $0x78] sm:$0xff] %v915
          %980 = vst [vmem:[#allocation2 + $0x80] sm:$0xff] %v916
          %981 = vst [vmem:[#allocation2 + $0x88] sm:$0xff] %v917
          %982 = vst [vmem:[#allocation2 + $0x90] sm:$0xff] %v918
          %983 = vst [vmem:[#allocation2 + $0x98] sm:$0xff] %v919
          %984 = vst [vmem:[#allocation2 + $0xa0] sm:$0xff] %v920
          %985 = vst [vmem:[#allocation2 + $0xa8] sm:$0xff] %v921
          %986 = vst [vmem:[#allocation2 + $0xb0] sm:$0xff] %v922
          %987 = vst [vmem:[#allocation2 + $0xb8] sm:$0xff] %v923
          %988 = vst [vmem:[#allocation2 + $0xc0] sm:$0xff] %v924
          %989 = vst [vmem:[#allocation2 + $0xc8] sm:$0xff] %v925
          %990 = vst [vmem:[#allocation2 + $0xd0] sm:$0xff] %v926
          %991 = vst [vmem:[#allocation2 + $0xd8] sm:$0xff] %v927
          %992 = vst [vmem:[#allocation2 + $0xe0] sm:$0xff] %v928
          %993 = vst [vmem:[#allocation2 + $0xe8] sm:$0xff] %v929
          %994 = vst [vmem:[#allocation2 + $0xf0] sm:$0xff] %v930
          %995 = vst [vmem:[#allocation2 + $0xf8] sm:$0xff] %v931
          %996 = vst [vmem:[#allocation2 + $0x100] sm:$0xff] %v932
          %997 = vst [vmem:[#allocation2 + $0x108] sm:$0xff] %v933
          %998 = vst [vmem:[#allocation2 + $0x110] sm:$0xff] %v934
          %999 = vst [vmem:[#allocation2 + $0x118] sm:$0xff] %v935
          %1000 = vst [vmem:[#allocation2 + $0x120] sm:$0xff] %v936
          %1001 = vst [vmem:[#allocation2 + $0x128] sm:$0xff] %v937
          %1002 = vst [vmem:[#allocation2 + $0x130] sm:$0xff] %v938
          %1003 = vst [vmem:[#allocation2 + $0x138] sm:$0xff] %v939
          %1004 = vst [vmem:[#allocation2 + $0x140] sm:$0xff] %v940
          %1005 = vst [vmem:[#allocation2 + $0x148] sm:$0xff] %v941
          %1006 = vst [vmem:[#allocation2 + $0x150] sm:$0xff] %v942
          %1007 = vst [vmem:[#allocation2 + $0x158] sm:$0xff] %v943
          %1008 = vst [vmem:[#allocation2 + $0x160] sm:$0xff] %v944
          %1009 = vst [vmem:[#allocation2 + $0x168] sm:$0xff] %v945
          %1010 = vst [vmem:[#allocation2 + $0x170] sm:$0xff] %v946
          %1011 = vst [vmem:[#allocation2 + $0x178] sm:$0xff] %v947
          %1012 = vst [vmem:[#allocation2 + $0x180] sm:$0xff] %v948
          %1013 = vst [vmem:[#allocation2 + $0x188] sm:$0xff] %v949
          %1014 = vst [vmem:[#allocation2 + $0x190] sm:$0xff] %v950
          %1015 = vst [vmem:[#allocation2 + $0x198] sm:$0xff] %v951
          %1016 = vst [vmem:[#allocation2 + $0x1a0] sm:$0xff] %v952
          %1017 = vst [vmem:[#allocation2 + $0x1a8] sm:$0xff] %v953
          %1018 = vst [vmem:[#allocation2 + $0x1b0] sm:$0xff] %v954
          %1019 = vst [vmem:[#allocation2 + $0x1b8] sm:$0xff] %v955
          %1020 = vst [vmem:[#allocation2 + $0x1c0] sm:$0xff] %v956
          %1021 = vst [vmem:[#allocation2 + $0x1c8] sm:$0xff] %v957
          %1022 = vst [vmem:[#allocation2 + $0x1d0] sm:$0xff] %v958
          %1023 = vst [vmem:[#allocation2 + $0x1d8] sm:$0xff] %v959
          %1024 = vst [vmem:[#allocation2 + $0x1e0] sm:$0xff] %v960
          %1025 = vst [vmem:[#allocation2 + $0x1e8] sm:$0xff] %v961
          %1026 = vst [vmem:[#allocation2 + $0x1f0] sm:$0xff] %v962
          %1027 = vst [vmem:[#allocation2 + $0x1f8] sm:$0xff] %v963
        $region52: #{tpu_custom_call.1} parent=31 // pred_fallthru
          _
        // Predicated region
        $region53: #{tpu_custom_call.1} parent=31 // pred_check
          %p1028 = pneg %p298
        $region54: #{tpu_custom_call.1} parent=31 // pred_check_branch
          %1030 = sbr.rel (%p1028) target = $region56
        $region55: #{tpu_custom_call.1} parent=31 // pred_region
          %v1031 = vld [vmem:[#allocation2] sm:$0xff]
          %v1032 = vld [vmem:[#allocation2 + $0x8] sm:$0xff]
          %v1033 = vld [vmem:[#allocation2 + $0x10] sm:$0xff]
          %v1034 = vld [vmem:[#allocation2 + $0x18] sm:$0xff]
          %v1035 = vld [vmem:[#allocation2 + $0x20] sm:$0xff]
          %v1036 = vld [vmem:[#allocation2 + $0x28] sm:$0xff]
          %v1037 = vld [vmem:[#allocation2 + $0x30] sm:$0xff]
          %v1038 = vld [vmem:[#allocation2 + $0x38] sm:$0xff]
          %v1039 = vld [vmem:[#allocation2 + $0x40] sm:$0xff]
          %v1040 = vld [vmem:[#allocation2 + $0x48] sm:$0xff]
          %v1041 = vld [vmem:[#allocation2 + $0x50] sm:$0xff]
          %v1042 = vld [vmem:[#allocation2 + $0x58] sm:$0xff]
          %v1043 = vld [vmem:[#allocation2 + $0x60] sm:$0xff]
          %v1044 = vld [vmem:[#allocation2 + $0x68] sm:$0xff]
          %v1045 = vld [vmem:[#allocation2 + $0x70] sm:$0xff]
          %v1046 = vld [vmem:[#allocation2 + $0x78] sm:$0xff]
          %v1047 = vld [vmem:[#allocation2 + $0x80] sm:$0xff]
          %v1048 = vld [vmem:[#allocation2 + $0x88] sm:$0xff]
          %v1049 = vld [vmem:[#allocation2 + $0x90] sm:$0xff]
          %v1050 = vld [vmem:[#allocation2 + $0x98] sm:$0xff]
          %v1051 = vld [vmem:[#allocation2 + $0xa0] sm:$0xff]
          %v1052 = vld [vmem:[#allocation2 + $0xa8] sm:$0xff]
          %v1053 = vld [vmem:[#allocation2 + $0xb0] sm:$0xff]
          %v1054 = vld [vmem:[#allocation2 + $0xb8] sm:$0xff]
          %v1055 = vld [vmem:[#allocation2 + $0xc0] sm:$0xff]
          %v1056 = vld [vmem:[#allocation2 + $0xc8] sm:$0xff]
          %v1057 = vld [vmem:[#allocation2 + $0xd0] sm:$0xff]
          %v1058 = vld [vmem:[#allocation2 + $0xd8] sm:$0xff]
          %v1059 = vld [vmem:[#allocation2 + $0xe0] sm:$0xff]
          %v1060 = vld [vmem:[#allocation2 + $0xe8] sm:$0xff]
          %v1061 = vld [vmem:[#allocation2 + $0xf0] sm:$0xff]
          %v1062 = vld [vmem:[#allocation2 + $0xf8] sm:$0xff]
          %v1063 = vld [vmem:[#allocation2 + $0x100] sm:$0xff]
          %v1064 = vld [vmem:[#allocation2 + $0x108] sm:$0xff]
          %v1065 = vld [vmem:[#allocation2 + $0x110] sm:$0xff]
          %v1066 = vld [vmem:[#allocation2 + $0x118] sm:$0xff]
          %v1067 = vld [vmem:[#allocation2 + $0x120] sm:$0xff]
          %v1068 = vld [vmem:[#allocation2 + $0x128] sm:$0xff]
          %v1069 = vld [vmem:[#allocation2 + $0x130] sm:$0xff]
          %v1070 = vld [vmem:[#allocation2 + $0x138] sm:$0xff]
          %v1071 = vld [vmem:[#allocation2 + $0x140] sm:$0xff]
          %v1072 = vld [vmem:[#allocation2 + $0x148] sm:$0xff]
          %v1073 = vld [vmem:[#allocation2 + $0x150] sm:$0xff]
          %v1074 = vld [vmem:[#allocation2 + $0x158] sm:$0xff]
          %v1075 = vld [vmem:[#allocation2 + $0x160] sm:$0xff]
          %v1076 = vld [vmem:[#allocation2 + $0x168] sm:$0xff]
          %v1077 = vld [vmem:[#allocation2 + $0x170] sm:$0xff]
          %v1078 = vld [vmem:[#allocation2 + $0x178] sm:$0xff]
          %v1079 = vld [vmem:[#allocation2 + $0x180] sm:$0xff]
          %v1080 = vld [vmem:[#allocation2 + $0x188] sm:$0xff]
          %v1081 = vld [vmem:[#allocation2 + $0x190] sm:$0xff]
          %v1082 = vld [vmem:[#allocation2 + $0x198] sm:$0xff]
          %v1083 = vld [vmem:[#allocation2 + $0x1a0] sm:$0xff]
          %v1084 = vld [vmem:[#allocation2 + $0x1a8] sm:$0xff]
          %v1085 = vld [vmem:[#allocation2 + $0x1b0] sm:$0xff]
          %v1086 = vld [vmem:[#allocation2 + $0x1b8] sm:$0xff]
          %v1087 = vld [vmem:[#allocation2 + $0x1c0] sm:$0xff]
          %v1088 = vld [vmem:[#allocation2 + $0x1c8] sm:$0xff]
          %v1089 = vld [vmem:[#allocation2 + $0x1d0] sm:$0xff]
          %v1090 = vld [vmem:[#allocation2 + $0x1d8] sm:$0xff]
          %v1091 = vld [vmem:[#allocation2 + $0x1e0] sm:$0xff]
          %v1092 = vld [vmem:[#allocation2 + $0x1e8] sm:$0xff]
          %v1093 = vld [vmem:[#allocation2 + $0x1f0] sm:$0xff]
          %v1094 = vld [vmem:[#allocation2 + $0x1f8] sm:$0xff]
          %v1095 = vld [vmem:[%s261] sm:$0x1]
          %v1097 = vlaneseq
          %v1098 = vshrl.u32 %v1097, 7
          %v1099 = vsub.s32 0, %v1098
          %v1100 = vrot.slane %v1095, %v1099
          %v1102 = vadd.f32 %v1031, %v1100
          %v1103 = vadd.f32 %v1032, %v1100
          %v1104 = vadd.f32 %v1033, %v1100
          %v1105 = vadd.f32 %v1034, %v1100
          %v1106 = vadd.f32 %v1035, %v1100
          %v1107 = vadd.f32 %v1036, %v1100
          %v1108 = vadd.f32 %v1037, %v1100
          %v1109 = vadd.f32 %v1038, %v1100
          %v1110 = vadd.f32 %v1039, %v1100
          %v1111 = vadd.f32 %v1040, %v1100
          %v1112 = vadd.f32 %v1041, %v1100
          %v1113 = vadd.f32 %v1042, %v1100
          %v1114 = vadd.f32 %v1043, %v1100
          %v1115 = vadd.f32 %v1044, %v1100
          %v1116 = vadd.f32 %v1045, %v1100
          %v1117 = vadd.f32 %v1046, %v1100
          %v1118 = vadd.f32 %v1047, %v1100
          %v1119 = vadd.f32 %v1048, %v1100
          %v1120 = vadd.f32 %v1049, %v1100
          %v1121 = vadd.f32 %v1050, %v1100
          %v1122 = vadd.f32 %v1051, %v1100
          %v1123 = vadd.f32 %v1052, %v1100
          %v1124 = vadd.f32 %v1053, %v1100
          %v1125 = vadd.f32 %v1054, %v1100
          %v1126 = vadd.f32 %v1055, %v1100
          %v1127 = vadd.f32 %v1056, %v1100
          %v1128 = vadd.f32 %v1057, %v1100
          %v1129 = vadd.f32 %v1058, %v1100
          %v1130 = vadd.f32 %v1059, %v1100
          %v1131 = vadd.f32 %v1060, %v1100
          %v1132 = vadd.f32 %v1061, %v1100
          %v1133 = vadd.f32 %v1062, %v1100
          %v1134 = vadd.f32 %v1063, %v1100
          %v1135 = vadd.f32 %v1064, %v1100
          %v1136 = vadd.f32 %v1065, %v1100
          %v1137 = vadd.f32 %v1066, %v1100
          %v1138 = vadd.f32 %v1067, %v1100
          %v1139 = vadd.f32 %v1068, %v1100
          %v1140 = vadd.f32 %v1069, %v1100
          %v1141 = vadd.f32 %v1070, %v1100
          %v1142 = vadd.f32 %v1071, %v1100
          %v1143 = vadd.f32 %v1072, %v1100
          %v1144 = vadd.f32 %v1073, %v1100
          %v1145 = vadd.f32 %v1074, %v1100
          %v1146 = vadd.f32 %v1075, %v1100
          %v1147 = vadd.f32 %v1076, %v1100
          %v1148 = vadd.f32 %v1077, %v1100
          %v1149 = vadd.f32 %v1078, %v1100
          %v1150 = vadd.f32 %v1079, %v1100
          %v1151 = vadd.f32 %v1080, %v1100
          %v1152 = vadd.f32 %v1081, %v1100
          %v1153 = vadd.f32 %v1082, %v1100
          %v1154 = vadd.f32 %v1083, %v1100
          %v1155 = vadd.f32 %v1084, %v1100
          %v1156 = vadd.f32 %v1085, %v1100
          %v1157 = vadd.f32 %v1086, %v1100
          %v1158 = vadd.f32 %v1087, %v1100
          %v1159 = vadd.f32 %v1088, %v1100
          %v1160 = vadd.f32 %v1089, %v1100
          %v1161 = vadd.f32 %v1090, %v1100
          %v1162 = vadd.f32 %v1091, %v1100
          %v1163 = vadd.f32 %v1092, %v1100
          %v1164 = vadd.f32 %v1093, %v1100
          %v1165 = vadd.f32 %v1094, %v1100
          %1166 = vst [vmem:[%s292] sm:$0xff] %v1102
          %1167 = vst [vmem:[%s292 + $0x8] sm:$0xff] %v1103
          %1168 = vst [vmem:[%s292 + $0x10] sm:$0xff] %v1104
          %1169 = vst [vmem:[%s292 + $0x18] sm:$0xff] %v1105
          %1170 = vst [vmem:[%s292 + $0x20] sm:$0xff] %v1106
          %1171 = vst [vmem:[%s292 + $0x28] sm:$0xff] %v1107
          %1172 = vst [vmem:[%s292 + $0x30] sm:$0xff] %v1108
          %1173 = vst [vmem:[%s292 + $0x38] sm:$0xff] %v1109
          %1174 = vst [vmem:[%s292 + $0x40] sm:$0xff] %v1110
          %1175 = vst [vmem:[%s292 + $0x48] sm:$0xff] %v1111
          %1176 = vst [vmem:[%s292 + $0x50] sm:$0xff] %v1112
          %1177 = vst [vmem:[%s292 + $0x58] sm:$0xff] %v1113
          %1178 = vst [vmem:[%s292 + $0x60] sm:$0xff] %v1114
          %1179 = vst [vmem:[%s292 + $0x68] sm:$0xff] %v1115
          %1180 = vst [vmem:[%s292 + $0x70] sm:$0xff] %v1116
          %1181 = vst [vmem:[%s292 + $0x78] sm:$0xff] %v1117
          %1182 = vst [vmem:[%s292 + $0x80] sm:$0xff] %v1118
          %1183 = vst [vmem:[%s292 + $0x88] sm:$0xff] %v1119
          %1184 = vst [vmem:[%s292 + $0x90] sm:$0xff] %v1120
          %1185 = vst [vmem:[%s292 + $0x98] sm:$0xff] %v1121
          %1186 = vst [vmem:[%s292 + $0xa0] sm:$0xff] %v1122
          %1187 = vst [vmem:[%s292 + $0xa8] sm:$0xff] %v1123
          %1188 = vst [vmem:[%s292 + $0xb0] sm:$0xff] %v1124
          %1189 = vst [vmem:[%s292 + $0xb8] sm:$0xff] %v1125
          %1190 = vst [vmem:[%s292 + $0xc0] sm:$0xff] %v1126
          %1191 = vst [vmem:[%s292 + $0xc8] sm:$0xff] %v1127
          %1192 = vst [vmem:[%s292 + $0xd0] sm:$0xff] %v1128
          %1193 = vst [vmem:[%s292 + $0xd8] sm:$0xff] %v1129
          %1194 = vst [vmem:[%s292 + $0xe0] sm:$0xff] %v1130
          %1195 = vst [vmem:[%s292 + $0xe8] sm:$0xff] %v1131
          %1196 = vst [vmem:[%s292 + $0xf0] sm:$0xff] %v1132
          %1197 = vst [vmem:[%s292 + $0xf8] sm:$0xff] %v1133
          %1198 = vst [vmem:[%s292 + $0x100] sm:$0xff] %v1134
          %1199 = vst [vmem:[%s292 + $0x108] sm:$0xff] %v1135
          %1200 = vst [vmem:[%s292 + $0x110] sm:$0xff] %v1136
          %1201 = vst [vmem:[%s292 + $0x118] sm:$0xff] %v1137
          %1202 = vst [vmem:[%s292 + $0x120] sm:$0xff] %v1138
          %1203 = vst [vmem:[%s292 + $0x128] sm:$0xff] %v1139
          %1204 = vst [vmem:[%s292 + $0x130] sm:$0xff] %v1140
          %1205 = vst [vmem:[%s292 + $0x138] sm:$0xff] %v1141
          %1206 = vst [vmem:[%s292 + $0x140] sm:$0xff] %v1142
          %1207 = vst [vmem:[%s292 + $0x148] sm:$0xff] %v1143
          %1208 = vst [vmem:[%s292 + $0x150] sm:$0xff] %v1144
          %1209 = vst [vmem:[%s292 + $0x158] sm:$0xff] %v1145
          %1210 = vst [vmem:[%s292 + $0x160] sm:$0xff] %v1146
          %1211 = vst [vmem:[%s292 + $0x168] sm:$0xff] %v1147
          %1212 = vst [vmem:[%s292 + $0x170] sm:$0xff] %v1148
          %1213 = vst [vmem:[%s292 + $0x178] sm:$0xff] %v1149
          %1214 = vst [vmem:[%s292 + $0x180] sm:$0xff] %v1150
          %1215 = vst [vmem:[%s292 + $0x188] sm:$0xff] %v1151
          %1216 = vst [vmem:[%s292 + $0x190] sm:$0xff] %v1152
          %1217 = vst [vmem:[%s292 + $0x198] sm:$0xff] %v1153
          %1218 = vst [vmem:[%s292 + $0x1a0] sm:$0xff] %v1154
          %1219 = vst [vmem:[%s292 + $0x1a8] sm:$0xff] %v1155
          %1220 = vst [vmem:[%s292 + $0x1b0] sm:$0xff] %v1156
          %1221 = vst [vmem:[%s292 + $0x1b8] sm:$0xff] %v1157
          %1222 = vst [vmem:[%s292 + $0x1c0] sm:$0xff] %v1158
          %1223 = vst [vmem:[%s292 + $0x1c8] sm:$0xff] %v1159
          %1224 = vst [vmem:[%s292 + $0x1d0] sm:$0xff] %v1160
          %1225 = vst [vmem:[%s292 + $0x1d8] sm:$0xff] %v1161
          %1226 = vst [vmem:[%s292 + $0x1e0] sm:$0xff] %v1162
          %1227 = vst [vmem:[%s292 + $0x1e8] sm:$0xff] %v1163
          %1228 = vst [vmem:[%s292 + $0x1f0] sm:$0xff] %v1164
          %1229 = vst [vmem:[%s292 + $0x1f8] sm:$0xff] %v1165
        $region56: #{tpu_custom_call.1} parent=31 // pred_fallthru
          _
        %s1230 = sand.u32 %s137, 1
        %s1231 = scalar_lea.sflag [#allocation8], %s1230
        %s1232 = sand.u32 %s137, 1
        %s1233 = smul.addr %s1232, 512
        %s1234 = scalar_lea.vmem [#allocation12], %s1233
        // Predicated region
        $region57: #{tpu_custom_call.1} parent=31 // pred_check
          %p1235 = pneg %p147
        $region58: #{tpu_custom_call.1} parent=31 // pred_check_branch
          %1237 = sbr.rel (%p1235) target = $region60
        $region59: #{tpu_custom_call.1} parent=31 // pred_region
          %s1238 = smul.u32 64, %s35
          %s1240 = ssub.s32 8192, 8192
          %1241 = vsyncadd %s1231, %s1240
          %s1242 = smul.addr %s1238, 128
          %s1243 = scalar_lea.hbm %s5, %s1242
          %s1244 = sshll.u32 %s1234, 4
          %s1245 = int_to_ptr.vmem [resolvable:$true] %s1244
          %1250 = dma.vmem_to_hbm [thread:$0]  %s1245, 8192, %s1243, %s1231, 128, 128, 8
        $region60: #{tpu_custom_call.1} parent=31 // pred_fallthru
          _
      $region32: #{tpu_custom_call.1} parent=5 // pred_fallthru
        _
      %p1251 = scmp.le.s32.totalorder 2, %s26
      // Predicated region
      $region61: #{tpu_custom_call.1} parent=5 // pred_check
        %p1252 = pneg %p1251
      $region62: #{tpu_custom_call.1} parent=5 // pred_check_branch
        %1254 = sbr.rel (%p1252) target = $region64
      $region63: #{tpu_custom_call.1} parent=5 // pred_region
        %s1255 = ssub.s32 %s26, 2
        // Predicated region
        $region65: #{tpu_custom_call.1} parent=63 // pred_check
          %p1256 = pneg %p153
        $region66: #{tpu_custom_call.1} parent=63 // pred_check_branch
          %1258 = sbr.rel (%p1256) target = $region68
        $region67: #{tpu_custom_call.1} parent=63 // pred_region
          %s1259 = sand.u32 %s138, 1
          %s1260 = scalar_lea.sflag [#allocation8], %s1259
          %s1261 = sand.u32 %s138, 1
          %s1262 = smul.addr %s1261, 512
          %s1263 = scalar_lea.vmem [#allocation12], %s1262
          %1264 = dma.done %s1260, 8192
        $region68: #{tpu_custom_call.1} parent=63 // pred_fallthru
          _
      $region64: #{tpu_custom_call.1} parent=5 // pred_fallthru
        _
    $region6: #{tpu_custom_call.1} parent=1 // loop_footer
      %s30 = sadd.s32 1, %s26
    $region7: #{tpu_custom_call.1} parent=1 // loop_footer_branch
      %25 = sbr.rel target = $region3
    $region8: #{tpu_custom_call.1} parent=1 // loop_exit
      _
    %1265 = vsyncpa [#allocation7], 1
    %s1266 = scalar_lea.sflag [#allocation7], 1
    %1267 = vsyncpa %s1266, 1
    %1268 = vsyncpa [#allocation10], 1
    %s1269 = scalar_lea.sflag [#allocation10], 1
    %1270 = vsyncpa %s1269, 1
    %1271 = vsyncpa [#allocation8], 1
    %s1272 = scalar_lea.sflag [#allocation8], 1
    %1273 = vsyncpa %s1272, 1

</llo_original>
